<compile_context>
chip_gen: v7x
topology: tpu7x:2x2x1
jax: 0.10.0
libtpu: 0.0.40
codegen_flags: <defaults>
</compile_context>

<pallas_src>
import functools

import jax
import jax.numpy as jnp
from jax import lax
from jax.experimental import pallas as pl
from jax.experimental.pallas import tpu as pltpu


# ----------------------------------------------------------------------------
# Kernel: one invocation per batch tile, full recurrence inside.
# ----------------------------------------------------------------------------
def _ecg_lstm_kernel(x_ref,     # (T, BT, D)  f32  time-major inputs
                     wih_ref,   # (D, 4H)     f32  input->gates  (W_ih^T)
                     bias_ref,  # (1, 4H)     f32  b_ih + b_hh (fused)
                     whh_ref,   # (H, 4H)     f32  hidden->gates (W_hh^T)
                     wfc_ref,   # (H, OP)     f32  fc weight^T, lane-padded to 128
                     bfc_ref,   # (1, OP)     f32  fc bias, lane-padded to 128
                     out_ref):  # (BT, OP)    f32  logits (lane-padded)
    T, BT, D = x_ref.shape
    H = whh_ref.shape[0]

    # Small weights: load once, resident in vregs across the whole recurrence.
    wih = wih_ref[...]
    whh = whh_ref[...]
    bias = bias_ref[...]

    def step(t, carry):
        h, c = carry                                        # f32 (BT, H)
        # Fused input projection (independent of h) + serial h@W_hh.
        # With the loop unrolled, the scheduler hoists the x-projection and
        # the pre-gate add off the h->h critical path.
        z = (jnp.dot(x_ref[t], wih, preferred_element_type=jnp.float32)
             + jnp.dot(h, whh, preferred_element_type=jnp.float32)
             + bias)                                        # (BT, 4H)
        # PyTorch gate order [i | f | g | o] along the 4H axis.
        # One full-vreg sigmoid pass; only the g slice needs tanh.
        s = jax.nn.sigmoid(z)                               # (BT, 4H), 1 EUP pass
        i_g = s[:, 0 * H:1 * H]
        f_g = s[:, 1 * H:2 * H]
        o_g = s[:, 3 * H:4 * H]
        g_g = jnp.tanh(z[:, 2 * H:3 * H])
        c_new = f_g * c + i_g * g_g
        h_new = o_g * jnp.tanh(c_new)
        return h_new, c_new

    h0 = jnp.zeros((BT, H), jnp.float32)                    # h0 = c0 = 0 (PyTorch)
    c0 = jnp.zeros((BT, H), jnp.float32)
    unroll = T if T <= 32 else 8                            # full unroll for small T
    h_last, _ = lax.fori_loop(0, T, step, (h0, c0), unroll=unroll)

    # Dropout(p=0.2) on lstm_out[:, -1, :] is identity in eval mode.
    # TODO(synk): training-mode dropout masking not implemented (inference only).
    logits = (jnp.dot(h_last, wfc_ref[...], preferred_element_type=jnp.float32)
              + bfc_ref[...])                               # (BT, OP)
    out_ref[...] = logits.astype(out_ref.dtype)


# ----------------------------------------------------------------------------
# One-time parameter preparation (hoisted out of the per-call forward).
# ----------------------------------------------------------------------------
def prepare_params(params, lane_pad=128):
    H = params["whh"].shape[0]
    O = params["wfc"].shape[1]
    OP = max(lane_pad, O)
    bias = (params["bih"] + params["bhh"]).astype(jnp.float32).reshape(1, 4 * H)
    wfc_p = jnp.zeros((H, OP), jnp.float32).at[:, :O].set(
        params["wfc"].astype(jnp.float32))
    bfc_p = jnp.zeros((1, OP), jnp.float32).at[:, :O].set(
        params["bfc"].astype(jnp.float32))
    return {
        "wih": params["wih"].astype(jnp.float32),   # (D, 4H)
        "whh": params["whh"].astype(jnp.float32),   # (H, 4H)
        "bias": bias,                               # (1, 4H)
        "wfc_p": wfc_p,                             # (H, OP)
        "bfc_p": bfc_p,                             # (1, OP)
    }


# ----------------------------------------------------------------------------
# Forward wrapper
# ----------------------------------------------------------------------------
@functools.partial(jax.jit, static_argnums=(2,))
def ecg_lstm_forward(x, p, out_dim):
    """x: (B, T, D) float32, batch_first like the PyTorch module."""
    B, T, D = x.shape
    H = p["whh"].shape[0]
    OP = p["wfc_p"].shape[1]

    # Batch tile: f32 sublane multiple; grow to 128 rows once batch is large
    # enough to fill MXU rows and keep the serial grid short.
    BT = 8 if B <= 8 else 128
    Bp = ((B + BT - 1) // BT) * BT

    # Time-major layout + zero-pad batch to the tile multiple.
    x_tm = jnp.transpose(x, (1, 0, 2)).astype(jnp.float32)          # (T, B, D)
    if Bp != B:
        x_tm = jnp.pad(x_tm, ((0, 0), (0, Bp - B), (0, 0)))         # (T, Bp, D)

    grid_spec = pltpu.PrefetchScalarGridSpec(
        num_scalar_prefetch=0,
        grid=(Bp // BT,),                                    # batch tiles only
        in_specs=[
            pl.BlockSpec((T, BT, D), lambda b: (0, b, 0)),   # full sequence (tiny: D=1)
            pl.BlockSpec((D, 4 * H), lambda b: (0, 0)),      # W_ih^T (resident)
            pl.BlockSpec((1, 4 * H), lambda b: (0, 0)),      # fused bias
            pl.BlockSpec((H, 4 * H), lambda b: (0, 0)),      # W_hh^T (resident)
            pl.BlockSpec((H, OP), lambda b: (0, 0)),         # W_fc^T (lane-padded)
            pl.BlockSpec((1, OP), lambda b: (0, 0)),         # b_fc   (lane-padded)
        ],
        out_specs=pl.BlockSpec((BT, OP), lambda b: (b, 0)),
    )

    out_p = pl.pallas_call(
        _ecg_lstm_kernel,
        out_shape=jax.ShapeDtypeStruct((Bp, OP), jnp.float32),
        grid_spec=grid_spec,
        compiler_params=pltpu.CompilerParams(
            dimension_semantics=("parallel",),               # batch is parallel
            vmem_limit_bytes=32 * 1024 * 1024,               # v5e default is 16 MiB
        ),
    )(x_tm, p["wih"], p["bias"], p["whh"], p["wfc_p"], p["bfc_p"])

    return out_p[:B, :out_dim]


# ----------------------------------------------------------------------------
# Pure-JAX reference (mirrors torch.nn.LSTM + Linear semantics, all f32)
# ----------------------------------------------------------------------------
def ecg_lstm_reference(x, params):
    B, T, D = x.shape
    H = params["whh"].shape[0]
    h = jnp.zeros((B, H), jnp.float32)
    c = jnp.zeros((B, H), jnp.float32)
    b = params["bih"] + params["bhh"]
    for t in range(T):
        z = x[:, t, :] @ params["wih"] + h @ params["whh"] + b
        i_g = jax.nn.sigmoid(z[:, 0 * H:1 * H])
        f_g = jax.nn.sigmoid(z[:, 1 * H:2 * H])
        g_g = jnp.tanh(z[:, 2 * H:3 * H])
        o_g = jax.nn.sigmoid(z[:, 3 * H:4 * H])
        c = f_g * c + i_g * g_g
        h = o_g * jnp.tanh(c)
    return h @ params["wfc"] + params["bfc"]


# ----------------------------------------------------------------------------
# Deterministic parameter init (PyTorch-style uniform(-1/sqrt(H), 1/sqrt(H)))
# ----------------------------------------------------------------------------
def init_params(key, input_size=1, hidden=32, output=5):
    ks = jax.random.split(key, 6)
    bound = 1.0 / jnp.sqrt(hidden)
    u = lambda k, shape: jax.random.uniform(k, shape, jnp.float32, -bound, bound)
    return {
        # Stored pre-transposed relative to PyTorch: (in_features, out_features).
        "wih": u(ks[0], (input_size, 4 * hidden)),   # == W_ih^T, gate order i,f,g,o
        "whh": u(ks[1], (hidden, 4 * hidden)),       # == W_hh^T
        "bih": u(ks[2], (4 * hidden,)),
        "bhh": u(ks[3], (4 * hidden,)),
        "wfc": u(ks[4], (hidden, output)),           # == fc.weight^T
        "bfc": u(ks[5], (output,)),
    }


if __name__ == "__main__":
    key = jax.random.PRNGKey(0)
    k_param, k_x = jax.random.split(key)

    B, T, D = 2, 8, 1       # batch=2, seq_len=8, input_size=1 (as in the module)
    H, O = 32, 5

    params = init_params(k_param, input_size=D, hidden=H, output=O)
    prepped = prepare_params(params)          # one-time weight prep (not per call)
    x = jax.random.normal(k_x, (B, T, D), jnp.float32)

    out = ecg_lstm_forward(x, prepped, O)
    out = jax.block_until_ready(out)

    ref = ecg_lstm_reference(x, params)
    assert out.shape == (B, O)
    # All-f32 kernel math => tight tolerance vs. the f32 reference.
    assert jnp.allclose(out, ref, atol=1e-3, rtol=1e-3), (out, ref)

    print("KERNEL_OK")
</pallas_src>

<mosaic_0001>
module attributes {stable_mosaic.version = 11 : i64} {
  func.func @_ecg_lstm_kernel(%arg0: i32, %arg1: memref<8x8x1xf32, #tpu.memory_space<vmem>>, %arg2: memref<1x128xf32, #tpu.memory_space<vmem>>, %arg3: memref<1x128xf32, #tpu.memory_space<vmem>>, %arg4: memref<32x128xf32, #tpu.memory_space<vmem>>, %arg5: memref<32x128xf32, #tpu.memory_space<vmem>>, %arg6: memref<1x128xf32, #tpu.memory_space<vmem>>, %arg7: memref<8x128xf32, #tpu.memory_space<vmem>>) attributes {dimension_semantics = [#tpu.dimension_semantics<parallel>], iteration_bounds = array<i64: 1>, scalar_prefetch = 0 : i64, scratch_operands = 0 : i64, tpu.core_type = #tpu.core_type<tc>, window_params = [{transform_indices = @transform_0, window_bounds = array<i64: 8, 8, 1>}, {pipeline_mode = #tpu.pipeline_mode<synchronous>, transform_indices = @transform_1, window_bounds = array<i64: 1, 128>}, {pipeline_mode = #tpu.pipeline_mode<synchronous>, transform_indices = @transform_2, window_bounds = array<i64: 1, 128>}, {pipeline_mode = #tpu.pipeline_mode<synchronous>, transform_indices = @transform_3, window_bounds = array<i64: 32, 128>}, {pipeline_mode = #tpu.pipeline_mode<synchronous>, transform_indices = @transform_4, window_bounds = array<i64: 32, 128>}, {pipeline_mode = #tpu.pipeline_mode<synchronous>, transform_indices = @transform_5, window_bounds = array<i64: 1, 128>}, {transform_indices = @transform_6, window_bounds = array<i64: 8, 128>}]} {
    %c0 = arith.constant 0 : index
    %c0_0 = arith.constant 0 : index
    %0 = vector.load %arg2[%c0, %c0_0] : memref<1x128xf32, #tpu.memory_space<vmem>>, vector<1x128xf32>
    %c0_1 = arith.constant 0 : index
    %c0_2 = arith.constant 0 : index
    %1 = vector.load %arg4[%c0_1, %c0_2] : memref<32x128xf32, #tpu.memory_space<vmem>>, vector<32x128xf32>
    %c0_3 = arith.constant 0 : index
    %c0_4 = arith.constant 0 : index
    %2 = vector.load %arg3[%c0_3, %c0_4] : memref<1x128xf32, #tpu.memory_space<vmem>>, vector<1x128xf32>
    %cst = arith.constant 0.000000e+00 : f32
    %3 = vector.broadcast %cst : f32 to vector<8x32xf32>
    %cst_5 = arith.constant 0.000000e+00 : f32
    %4 = vector.broadcast %cst_5 : f32 to vector<8x32xf32>
    %c0_i32 = arith.constant 0 : i32
    %5 = arith.index_cast %c0_i32 : i32 to index
    %c0_6 = arith.constant 0 : index
    %c0_7 = arith.constant 0 : index
    %6 = vector.load %arg1[%5, %c0_6, %c0_7] : memref<8x8x1xf32, #tpu.memory_space<vmem>>, vector<1x8x1xf32>
    %7 = vector.shape_cast %6 : vector<1x8x1xf32> to vector<8x1xf32>
    %cst_8 = arith.constant dense<0.000000e+00> : vector<8x128xf32>
    %8 = tpu.matmul %7, %0, %cst_8 {dimension_numbers = #tpu.dot_dimension_numbers<[1], [0], [0], [1], [0, 0, 1, 1], [], []>} : vector<8x1xf32>, vector<1x128xf32>, vector<8x128xf32> -> vector<8x128xf32>
    %cst_9 = arith.constant dense<0.000000e+00> : vector<8x128xf32>
    %9 = tpu.matmul %3, %1, %cst_9 {dimension_numbers = #tpu.dot_dimension_numbers<[1], [0], [0], [1], [0, 0, 1, 1], [], []>} : vector<8x32xf32>, vector<32x128xf32>, vector<8x128xf32> -> vector<8x128xf32>
    %10 = arith.addf %8, %9 : vector<8x128xf32>
    %11 = vector.broadcast %2 : vector<1x128xf32> to vector<8x128xf32>
    %12 = arith.addf %10, %11 : vector<8x128xf32>
    %13 = arith.negf %12 : vector<8x128xf32>
    %14 = math.exp %13 : vector<8x128xf32>
    %cst_10 = arith.constant 1.000000e+00 : f32
    %15 = vector.broadcast %cst_10 : f32 to vector<8x128xf32>
    %16 = arith.addf %15, %14 : vector<8x128xf32>
    %17 = arith.divf %15, %16 : vector<8x128xf32>
    %18 = vector.extract_strided_slice %17 {offsets = [0, 0], sizes = [8, 32], strides = [1, 1]} : vector<8x128xf32> to vector<8x32xf32>
    %19 = vector.extract_strided_slice %17 {offsets = [0, 32], sizes = [8, 32], strides = [1, 1]} : vector<8x128xf32> to vector<8x32xf32>
    %20 = vector.extract_strided_slice %17 {offsets = [0, 96], sizes = [8, 32], strides = [1, 1]} : vector<8x128xf32> to vector<8x32xf32>
    %21 = vector.extract_strided_slice %12 {offsets = [0, 64], sizes = [8, 32], strides = [1, 1]} : vector<8x128xf32> to vector<8x32xf32>
    %22 = math.tanh %21 : vector<8x32xf32>
    %23 = arith.mulf %19, %4 : vector<8x32xf32>
    %24 = arith.mulf %18, %22 : vector<8x32xf32>
    %25 = arith.addf %23, %24 : vector<8x32xf32>
    %26 = math.tanh %25 : vector<8x32xf32>
    %27 = arith.mulf %20, %26 : vector<8x32xf32>
    %c1_i32 = arith.constant 1 : i32
    %28 = arith.index_cast %c1_i32 : i32 to index
    %c0_11 = arith.constant 0 : index
    %c0_12 = arith.constant 0 : index
    %29 = vector.load %arg1[%28, %c0_11, %c0_12] : memref<8x8x1xf32, #tpu.memory_space<vmem>>, vector<1x8x1xf32>
    %30 = vector.shape_cast %29 : vector<1x8x1xf32> to vector<8x1xf32>
    %cst_13 = arith.constant dense<0.000000e+00> : vector<8x128xf32>
    %31 = tpu.matmul %30, %0, %cst_13 {dimension_numbers = #tpu.dot_dimension_numbers<[1], [0], [0], [1], [0, 0, 1, 1], [], []>} : vector<8x1xf32>, vector<1x128xf32>, vector<8x128xf32> -> vector<8x128xf32>
    %cst_14 = arith.constant dense<0.000000e+00> : vector<8x128xf32>
    %32 = tpu.matmul %27, %1, %cst_14 {dimension_numbers = #tpu.dot_dimension_numbers<[1], [0], [0], [1], [0, 0, 1, 1], [], []>} : vector<8x32xf32>, vector<32x128xf32>, vector<8x128xf32> -> vector<8x128xf32>
    %33 = arith.addf %31, %32 : vector<8x128xf32>
    %34 = vector.broadcast %2 : vector<1x128xf32> to vector<8x128xf32>
    %35 = arith.addf %33, %34 : vector<8x128xf32>
    %36 = arith.negf %35 : vector<8x128xf32>
    %37 = math.exp %36 : vector<8x128xf32>
    %cst_15 = arith.constant 1.000000e+00 : f32
    %38 = vector.broadcast %cst_15 : f32 to vector<8x128xf32>
    %39 = arith.addf %38, %37 : vector<8x128xf32>
    %40 = arith.divf %38, %39 : vector<8x128xf32>
    %41 = vector.extract_strided_slice %40 {offsets = [0, 0], sizes = [8, 32], strides = [1, 1]} : vector<8x128xf32> to vector<8x32xf32>
    %42 = vector.extract_strided_slice %40 {offsets = [0, 32], sizes = [8, 32], strides = [1, 1]} : vector<8x128xf32> to vector<8x32xf32>
    %43 = vector.extract_strided_slice %40 {offsets = [0, 96], sizes = [8, 32], strides = [1, 1]} : vector<8x128xf32> to vector<8x32xf32>
    %44 = vector.extract_strided_slice %35 {offsets = [0, 64], sizes = [8, 32], strides = [1, 1]} : vector<8x128xf32> to vector<8x32xf32>
    %45 = math.tanh %44 : vector<8x32xf32>
    %46 = arith.mulf %42, %25 : vector<8x32xf32>
    %47 = arith.mulf %41, %45 : vector<8x32xf32>
    %48 = arith.addf %46, %47 : vector<8x32xf32>
    %49 = math.tanh %48 : vector<8x32xf32>
    %50 = arith.mulf %43, %49 : vector<8x32xf32>
    %c2_i32 = arith.constant 2 : i32
    %51 = arith.index_cast %c2_i32 : i32 to index
    %c0_16 = arith.constant 0 : index
    %c0_17 = arith.constant 0 : index
    %52 = vector.load %arg1[%51, %c0_16, %c0_17] : memref<8x8x1xf32, #tpu.memory_space<vmem>>, vector<1x8x1xf32>
    %53 = vector.shape_cast %52 : vector<1x8x1xf32> to vector<8x1xf32>
    %cst_18 = arith.constant dense<0.000000e+00> : vector<8x128xf32>
    %54 = tpu.matmul %53, %0, %cst_18 {dimension_numbers = #tpu.dot_dimension_numbers<[1], [0], [0], [1], [0, 0, 1, 1], [], []>} : vector<8x1xf32>, vector<1x128xf32>, vector<8x128xf32> -> vector<8x128xf32>
    %cst_19 = arith.constant dense<0.000000e+00> : vector<8x128xf32>
    %55 = tpu.matmul %50, %1, %cst_19 {dimension_numbers = #tpu.dot_dimension_numbers<[1], [0], [0], [1], [0, 0, 1, 1], [], []>} : vector<8x32xf32>, vector<32x128xf32>, vector<8x128xf32> -> vector<8x128xf32>
    %56 = arith.addf %54, %55 : vector<8x128xf32>
    %57 = vector.broadcast %2 : vector<1x128xf32> to vector<8x128xf32>
    %58 = arith.addf %56, %57 : vector<8x128xf32>
    %59 = arith.negf %58 : vector<8x128xf32>
    %60 = math.exp %59 : vector<8x128xf32>
    %cst_20 = arith.constant 1.000000e+00 : f32
    %61 = vector.broadcast %cst_20 : f32 to vector<8x128xf32>
    %62 = arith.addf %61, %60 : vector<8x128xf32>
    %63 = arith.divf %61, %62 : vector<8x128xf32>
    %64 = vector.extract_strided_slice %63 {offsets = [0, 0], sizes = [8, 32], strides = [1, 1]} : vector<8x128xf32> to vector<8x32xf32>
    %65 = vector.extract_strided_slice %63 {offsets = [0, 32], sizes = [8, 32], strides = [1, 1]} : vector<8x128xf32> to vector<8x32xf32>
    %66 = vector.extract_strided_slice %63 {offsets = [0, 96], sizes = [8, 32], strides = [1, 1]} : vector<8x128xf32> to vector<8x32xf32>
    %67 = vector.extract_strided_slice %58 {offsets = [0, 64], sizes = [8, 32], strides = [1, 1]} : vector<8x128xf32> to vector<8x32xf32>
    %68 = math.tanh %67 : vector<8x32xf32>
    %69 = arith.mulf %65, %48 : vector<8x32xf32>
    %70 = arith.mulf %64, %68 : vector<8x32xf32>
    %71 = arith.addf %69, %70 : vector<8x32xf32>
    %72 = math.tanh %71 : vector<8x32xf32>
    %73 = arith.mulf %66, %72 : vector<8x32xf32>
    %c3_i32 = arith.constant 3 : i32
    %74 = arith.index_cast %c3_i32 : i32 to index
    %c0_21 = arith.constant 0 : index
    %c0_22 = arith.constant 0 : index
    %75 = vector.load %arg1[%74, %c0_21, %c0_22] : memref<8x8x1xf32, #tpu.memory_space<vmem>>, vector<1x8x1xf32>
    %76 = vector.shape_cast %75 : vector<1x8x1xf32> to vector<8x1xf32>
    %cst_23 = arith.constant dense<0.000000e+00> : vector<8x128xf32>
    %77 = tpu.matmul %76, %0, %cst_23 {dimension_numbers = #tpu.dot_dimension_numbers<[1], [0], [0], [1], [0, 0, 1, 1], [], []>} : vector<8x1xf32>, vector<1x128xf32>, vector<8x128xf32> -> vector<8x128xf32>
    %cst_24 = arith.constant dense<0.000000e+00> : vector<8x128xf32>
    %78 = tpu.matmul %73, %1, %cst_24 {dimension_numbers = #tpu.dot_dimension_numbers<[1], [0], [0], [1], [0, 0, 1, 1], [], []>} : vector<8x32xf32>, vector<32x128xf32>, vector<8x128xf32> -> vector<8x128xf32>
    %79 = arith.addf %77, %78 : vector<8x128xf32>
    %80 = vector.broadcast %2 : vector<1x128xf32> to vector<8x128xf32>
    %81 = arith.addf %79, %80 : vector<8x128xf32>
    %82 = arith.negf %81 : vector<8x128xf32>
    %83 = math.exp %82 : vector<8x128xf32>
    %cst_25 = arith.constant 1.000000e+00 : f32
    %84 = vector.broadcast %cst_25 : f32 to vector<8x128xf32>
    %85 = arith.addf %84, %83 : vector<8x128xf32>
    %86 = arith.divf %84, %85 : vector<8x128xf32>
    %87 = vector.extract_strided_slice %86 {offsets = [0, 0], sizes = [8, 32], strides = [1, 1]} : vector<8x128xf32> to vector<8x32xf32>
    %88 = vector.extract_strided_slice %86 {offsets = [0, 32], sizes = [8, 32], strides = [1, 1]} : vector<8x128xf32> to vector<8x32xf32>
    %89 = vector.extract_strided_slice %86 {offsets = [0, 96], sizes = [8, 32], strides = [1, 1]} : vector<8x128xf32> to vector<8x32xf32>
    %90 = vector.extract_strided_slice %81 {offsets = [0, 64], sizes = [8, 32], strides = [1, 1]} : vector<8x128xf32> to vector<8x32xf32>
    %91 = math.tanh %90 : vector<8x32xf32>
    %92 = arith.mulf %88, %71 : vector<8x32xf32>
    %93 = arith.mulf %87, %91 : vector<8x32xf32>
    %94 = arith.addf %92, %93 : vector<8x32xf32>
    %95 = math.tanh %94 : vector<8x32xf32>
    %96 = arith.mulf %89, %95 : vector<8x32xf32>
    %c4_i32 = arith.constant 4 : i32
    %97 = arith.index_cast %c4_i32 : i32 to index
    %c0_26 = arith.constant 0 : index
    %c0_27 = arith.constant 0 : index
    %98 = vector.load %arg1[%97, %c0_26, %c0_27] : memref<8x8x1xf32, #tpu.memory_space<vmem>>, vector<1x8x1xf32>
    %99 = vector.shape_cast %98 : vector<1x8x1xf32> to vector<8x1xf32>
    %cst_28 = arith.constant dense<0.000000e+00> : vector<8x128xf32>
    %100 = tpu.matmul %99, %0, %cst_28 {dimension_numbers = #tpu.dot_dimension_numbers<[1], [0], [0], [1], [0, 0, 1, 1], [], []>} : vector<8x1xf32>, vector<1x128xf32>, vector<8x128xf32> -> vector<8x128xf32>
    %cst_29 = arith.constant dense<0.000000e+00> : vector<8x128xf32>
    %101 = tpu.matmul %96, %1, %cst_29 {dimension_numbers = #tpu.dot_dimension_numbers<[1], [0], [0], [1], [0, 0, 1, 1], [], []>} : vector<8x32xf32>, vector<32x128xf32>, vector<8x128xf32> -> vector<8x128xf32>
    %102 = arith.addf %100, %101 : vector<8x128xf32>
    %103 = vector.broadcast %2 : vector<1x128xf32> to vector<8x128xf32>
    %104 = arith.addf %102, %103 : vector<8x128xf32>
    %105 = arith.negf %104 : vector<8x128xf32>
    %106 = math.exp %105 : vector<8x128xf32>
    %cst_30 = arith.constant 1.000000e+00 : f32
    %107 = vector.broadcast %cst_30 : f32 to vector<8x128xf32>
    %108 = arith.addf %107, %106 : vector<8x128xf32>
    %109 = arith.divf %107, %108 : vector<8x128xf32>
    %110 = vector.extract_strided_slice %109 {offsets = [0, 0], sizes = [8, 32], strides = [1, 1]} : vector<8x128xf32> to vector<8x32xf32>
    %111 = vector.extract_strided_slice %109 {offsets = [0, 32], sizes = [8, 32], strides = [1, 1]} : vector<8x128xf32> to vector<8x32xf32>
    %112 = vector.extract_strided_slice %109 {offsets = [0, 96], sizes = [8, 32], strides = [1, 1]} : vector<8x128xf32> to vector<8x32xf32>
    %113 = vector.extract_strided_slice %104 {offsets = [0, 64], sizes = [8, 32], strides = [1, 1]} : vector<8x128xf32> to vector<8x32xf32>
    %114 = math.tanh %113 : vector<8x32xf32>
    %115 = arith.mulf %111, %94 : vector<8x32xf32>
    %116 = arith.mulf %110, %114 : vector<8x32xf32>
    %117 = arith.addf %115, %116 : vector<8x32xf32>
    %118 = math.tanh %117 : vector<8x32xf32>
    %119 = arith.mulf %112, %118 : vector<8x32xf32>
    %c5_i32 = arith.constant 5 : i32
    %120 = arith.index_cast %c5_i32 : i32 to index
    %c0_31 = arith.constant 0 : index
    %c0_32 = arith.constant 0 : index
    %121 = vector.load %arg1[%120, %c0_31, %c0_32] : memref<8x8x1xf32, #tpu.memory_space<vmem>>, vector<1x8x1xf32>
    %122 = vector.shape_cast %121 : vector<1x8x1xf32> to vector<8x1xf32>
    %cst_33 = arith.constant dense<0.000000e+00> : vector<8x128xf32>
    %123 = tpu.matmul %122, %0, %cst_33 {dimension_numbers = #tpu.dot_dimension_numbers<[1], [0], [0], [1], [0, 0, 1, 1], [], []>} : vector<8x1xf32>, vector<1x128xf32>, vector<8x128xf32> -> vector<8x128xf32>
    %cst_34 = arith.constant dense<0.000000e+00> : vector<8x128xf32>
    %124 = tpu.matmul %119, %1, %cst_34 {dimension_numbers = #tpu.dot_dimension_numbers<[1], [0], [0], [1], [0, 0, 1, 1], [], []>} : vector<8x32xf32>, vector<32x128xf32>, vector<8x128xf32> -> vector<8x128xf32>
    %125 = arith.addf %123, %124 : vector<8x128xf32>
    %126 = vector.broadcast %2 : vector<1x128xf32> to vector<8x128xf32>
    %127 = arith.addf %125, %126 : vector<8x128xf32>
    %128 = arith.negf %127 : vector<8x128xf32>
    %129 = math.exp %128 : vector<8x128xf32>
    %cst_35 = arith.constant 1.000000e+00 : f32
    %130 = vector.broadcast %cst_35 : f32 to vector<8x128xf32>
    %131 = arith.addf %130, %129 : vector<8x128xf32>
    %132 = arith.divf %130, %131 : vector<8x128xf32>
    %133 = vector.extract_strided_slice %132 {offsets = [0, 0], sizes = [8, 32], strides = [1, 1]} : vector<8x128xf32> to vector<8x32xf32>
    %134 = vector.extract_strided_slice %132 {offsets = [0, 32], sizes = [8, 32], strides = [1, 1]} : vector<8x128xf32> to vector<8x32xf32>
    %135 = vector.extract_strided_slice %132 {offsets = [0, 96], sizes = [8, 32], strides = [1, 1]} : vector<8x128xf32> to vector<8x32xf32>
    %136 = vector.extract_strided_slice %127 {offsets = [0, 64], sizes = [8, 32], strides = [1, 1]} : vector<8x128xf32> to vector<8x32xf32>
    %137 = math.tanh %136 : vector<8x32xf32>
    %138 = arith.mulf %134, %117 : vector<8x32xf32>
    %139 = arith.mulf %133, %137 : vector<8x32xf32>
    %140 = arith.addf %138, %139 : vector<8x32xf32>
    %141 = math.tanh %140 : vector<8x32xf32>
    %142 = arith.mulf %135, %141 : vector<8x32xf32>
    %c6_i32 = arith.constant 6 : i32
    %143 = arith.index_cast %c6_i32 : i32 to index
    %c0_36 = arith.constant 0 : index
    %c0_37 = arith.constant 0 : index
    %144 = vector.load %arg1[%143, %c0_36, %c0_37] : memref<8x8x1xf32, #tpu.memory_space<vmem>>, vector<1x8x1xf32>
    %145 = vector.shape_cast %144 : vector<1x8x1xf32> to vector<8x1xf32>
    %cst_38 = arith.constant dense<0.000000e+00> : vector<8x128xf32>
    %146 = tpu.matmul %145, %0, %cst_38 {dimension_numbers = #tpu.dot_dimension_numbers<[1], [0], [0], [1], [0, 0, 1, 1], [], []>} : vector<8x1xf32>, vector<1x128xf32>, vector<8x128xf32> -> vector<8x128xf32>
    %cst_39 = arith.constant dense<0.000000e+00> : vector<8x128xf32>
    %147 = tpu.matmul %142, %1, %cst_39 {dimension_numbers = #tpu.dot_dimension_numbers<[1], [0], [0], [1], [0, 0, 1, 1], [], []>} : vector<8x32xf32>, vector<32x128xf32>, vector<8x128xf32> -> vector<8x128xf32>
    %148 = arith.addf %146, %147 : vector<8x128xf32>
    %149 = vector.broadcast %2 : vector<1x128xf32> to vector<8x128xf32>
    %150 = arith.addf %148, %149 : vector<8x128xf32>
    %151 = arith.negf %150 : vector<8x128xf32>
    %152 = math.exp %151 : vector<8x128xf32>
    %cst_40 = arith.constant 1.000000e+00 : f32
    %153 = vector.broadcast %cst_40 : f32 to vector<8x128xf32>
    %154 = arith.addf %153, %152 : vector<8x128xf32>
    %155 = arith.divf %153, %154 : vector<8x128xf32>
    %156 = vector.extract_strided_slice %155 {offsets = [0, 0], sizes = [8, 32], strides = [1, 1]} : vector<8x128xf32> to vector<8x32xf32>
    %157 = vector.extract_strided_slice %155 {offsets = [0, 32], sizes = [8, 32], strides = [1, 1]} : vector<8x128xf32> to vector<8x32xf32>
    %158 = vector.extract_strided_slice %155 {offsets = [0, 96], sizes = [8, 32], strides = [1, 1]} : vector<8x128xf32> to vector<8x32xf32>
    %159 = vector.extract_strided_slice %150 {offsets = [0, 64], sizes = [8, 32], strides = [1, 1]} : vector<8x128xf32> to vector<8x32xf32>
    %160 = math.tanh %159 : vector<8x32xf32>
    %161 = arith.mulf %157, %140 : vector<8x32xf32>
    %162 = arith.mulf %156, %160 : vector<8x32xf32>
    %163 = arith.addf %161, %162 : vector<8x32xf32>
    %164 = math.tanh %163 : vector<8x32xf32>
    %165 = arith.mulf %158, %164 : vector<8x32xf32>
    %c7_i32 = arith.constant 7 : i32
    %166 = arith.index_cast %c7_i32 : i32 to index
    %c0_41 = arith.constant 0 : index
    %c0_42 = arith.constant 0 : index
    %167 = vector.load %arg1[%166, %c0_41, %c0_42] : memref<8x8x1xf32, #tpu.memory_space<vmem>>, vector<1x8x1xf32>
    %168 = vector.shape_cast %167 : vector<1x8x1xf32> to vector<8x1xf32>
    %cst_43 = arith.constant dense<0.000000e+00> : vector<8x128xf32>
    %169 = tpu.matmul %168, %0, %cst_43 {dimension_numbers = #tpu.dot_dimension_numbers<[1], [0], [0], [1], [0, 0, 1, 1], [], []>} : vector<8x1xf32>, vector<1x128xf32>, vector<8x128xf32> -> vector<8x128xf32>
    %cst_44 = arith.constant dense<0.000000e+00> : vector<8x128xf32>
    %170 = tpu.matmul %165, %1, %cst_44 {dimension_numbers = #tpu.dot_dimension_numbers<[1], [0], [0], [1], [0, 0, 1, 1], [], []>} : vector<8x32xf32>, vector<32x128xf32>, vector<8x128xf32> -> vector<8x128xf32>
    %171 = arith.addf %169, %170 : vector<8x128xf32>
    %172 = vector.broadcast %2 : vector<1x128xf32> to vector<8x128xf32>
    %173 = arith.addf %171, %172 : vector<8x128xf32>
    %174 = arith.negf %173 : vector<8x128xf32>
    %175 = math.exp %174 : vector<8x128xf32>
    %cst_45 = arith.constant 1.000000e+00 : f32
    %176 = vector.broadcast %cst_45 : f32 to vector<8x128xf32>
    %177 = arith.addf %176, %175 : vector<8x128xf32>
    %178 = arith.divf %176, %177 : vector<8x128xf32>
    %179 = vector.extract_strided_slice %178 {offsets = [0, 0], sizes = [8, 32], strides = [1, 1]} : vector<8x128xf32> to vector<8x32xf32>
    %180 = vector.extract_strided_slice %178 {offsets = [0, 32], sizes = [8, 32], strides = [1, 1]} : vector<8x128xf32> to vector<8x32xf32>
    %181 = vector.extract_strided_slice %178 {offsets = [0, 96], sizes = [8, 32], strides = [1, 1]} : vector<8x128xf32> to vector<8x32xf32>
    %182 = vector.extract_strided_slice %173 {offsets = [0, 64], sizes = [8, 32], strides = [1, 1]} : vector<8x128xf32> to vector<8x32xf32>
    %183 = math.tanh %182 : vector<8x32xf32>
    %184 = arith.mulf %180, %163 : vector<8x32xf32>
    %185 = arith.mulf %179, %183 : vector<8x32xf32>
    %186 = arith.addf %184, %185 : vector<8x32xf32>
    %187 = math.tanh %186 : vector<8x32xf32>
    %188 = arith.mulf %181, %187 : vector<8x32xf32>
    %c8_i32 = arith.constant 8 : i32
    %c0_46 = arith.constant 0 : index
    %c0_47 = arith.constant 0 : index
    %189 = vector.load %arg5[%c0_46, %c0_47] : memref<32x128xf32, #tpu.memory_space<vmem>>, vector<32x128xf32>
    %cst_48 = arith.constant dense<0.000000e+00> : vector<8x128xf32>
    %190 = tpu.matmul %188, %189, %cst_48 {dimension_numbers = #tpu.dot_dimension_numbers<[1], [0], [0], [1], [0, 0, 1, 1], [], []>} : vector<8x32xf32>, vector<32x128xf32>, vector<8x128xf32> -> vector<8x128xf32>
    %c0_49 = arith.constant 0 : index
    %c0_50 = arith.constant 0 : index
    %191 = vector.load %arg6[%c0_49, %c0_50] : memref<1x128xf32, #tpu.memory_space<vmem>>, vector<1x128xf32>
    %192 = vector.broadcast %191 : vector<1x128xf32> to vector<8x128xf32>
    %193 = arith.addf %190, %192 : vector<8x128xf32>
    %c0_51 = arith.constant 0 : index
    %c0_52 = arith.constant 0 : index
    %194 = vector.load %arg7[%c0_51, %c0_52] : memref<8x128xf32, #tpu.memory_space<vmem>>, vector<8x128xf32>
    tpu.vector_store %arg7[%c0_51, %c0_52], %193 {strides = array<i32>} : memref<8x128xf32, #tpu.memory_space<vmem>>, vector<8x128xf32>,
    return
  }
  func.func @transform_0(%arg0: i32) -> (i32, i32, i32) {
    %c0_i32 = arith.constant 0 : i32
    %c0_i32_0 = arith.constant 0 : i32
    %c0_i32_1 = arith.constant 0 : i32
    return %c0_i32, %arg0, %c0_i32_0 : i32, i32, i32
  }
  func.func @transform_1(%arg0: i32) -> (i32, i32) {
    %c0_i32 = arith.constant 0 : i32
    %c0_i32_0 = arith.constant 0 : i32
    %c0_i32_1 = arith.constant 0 : i32
    return %c0_i32, %c0_i32_0 : i32, i32
  }
  func.func @transform_2(%arg0: i32) -> (i32, i32) {
    %c0_i32 = arith.constant 0 : i32
    %c0_i32_0 = arith.constant 0 : i32
    %c0_i32_1 = arith.constant 0 : i32
    return %c0_i32, %c0_i32_0 : i32, i32
  }
  func.func @transform_3(%arg0: i32) -> (i32, i32) {
    %c0_i32 = arith.constant 0 : i32
    %c0_i32_0 = arith.constant 0 : i32
    %c0_i32_1 = arith.constant 0 : i32
    return %c0_i32, %c0_i32_0 : i32, i32
  }
  func.func @transform_4(%arg0: i32) -> (i32, i32) {
    %c0_i32 = arith.constant 0 : i32
    %c0_i32_0 = arith.constant 0 : i32
    %c0_i32_1 = arith.constant 0 : i32
    return %c0_i32, %c0_i32_0 : i32, i32
  }
  func.func @transform_5(%arg0: i32) -> (i32, i32) {
    %c0_i32 = arith.constant 0 : i32
    %c0_i32_0 = arith.constant 0 : i32
    %c0_i32_1 = arith.constant 0 : i32
    return %c0_i32, %c0_i32_0 : i32, i32
  }
  func.func @transform_6(%arg0: i32) -> (i32, i32) {
    %c0_i32 = arith.constant 0 : i32
    %c0_i32_0 = arith.constant 0 : i32
    return %arg0, %c0_i32 : i32, i32
  }
}

</mosaic_0001>

<llo_original>
// kernel: ecg_lstm_forward.1
$region0: #{ecg_lstm_forward.1}
  #allocation0 [shape = 'u32[]', space=smem, size = 0x4, offset = 0x4, fixed_abs, tag = 'smem constant byte address 0x4 - core index']
  #allocation1 [shape = 'u32[144,128]{1,0:T(1,128)}', space=vmem, size = 0x12000, scoped, tag = 'internal scratch']
  %s0 = inlined_call_operand.vmem [shape: f32[8,8,1], index: 0, kind: input, shape index: {}]
  %s1 = inlined_call_operand.vmem [shape: f32[1,128], index: 1, kind: input, shape index: {}]
  %s2 = inlined_call_operand.vmem [shape: f32[1,128], index: 2, kind: input, shape index: {}]
  %s3 = inlined_call_operand.vmem [shape: f32[32,128], index: 3, kind: input, shape index: {}]
  %s4 = inlined_call_operand.vmem [shape: f32[32,128], index: 4, kind: input, shape index: {}]
  %s5 = inlined_call_operand.vmem [shape: f32[1,128], index: 5, kind: input, shape index: {}]
  %s6 = inlined_call_operand.vmem [shape: f32[8,128], index: 6, kind: output, shape index: {}]
  %s7 = sld [smem:[#allocation0]]
  $region34: #{ecg_lstm_forward.1} parent=0
    _
  %s9 = ssub.s32 1, %s7
  %s10 = scalar_select 0, %s9, %s7
  // Predicated region
  $region2: #{ecg_lstm_forward.1} parent=0 // pred_check
    _
  $region3: #{ecg_lstm_forward.1} parent=0 // pred_check_branch
    %12 = sbr.rel (0) target = $region5
  $region4: #{ecg_lstm_forward.1} parent=0 // pred_region
    _
  $region5: #{ecg_lstm_forward.1} parent=0 // pred_fallthru
    _
  // Predicated region
  $region6: #{ecg_lstm_forward.1} parent=0 // pred_check
    _
  $region7: #{ecg_lstm_forward.1} parent=0 // pred_check_branch
    %14 = sbr.rel (0) target = $region9
  $region8: #{ecg_lstm_forward.1} parent=0 // pred_region
    _
  $region9: #{ecg_lstm_forward.1} parent=0 // pred_fallthru
    _
  // Predicated region
  $region10: #{ecg_lstm_forward.1} parent=0 // pred_check
    _
  $region11: #{ecg_lstm_forward.1} parent=0 // pred_check_branch
    %16 = sbr.rel (0) target = $region13
  $region12: #{ecg_lstm_forward.1} parent=0 // pred_region
    _
  $region13: #{ecg_lstm_forward.1} parent=0 // pred_fallthru
    _
  // Predicated region
  $region14: #{ecg_lstm_forward.1} parent=0 // pred_check
    _
  $region15: #{ecg_lstm_forward.1} parent=0 // pred_check_branch
    %18 = sbr.rel (0) target = $region17
  $region16: #{ecg_lstm_forward.1} parent=0 // pred_region
    _
  $region17: #{ecg_lstm_forward.1} parent=0 // pred_fallthru
    _
  // Predicated region
  $region18: #{ecg_lstm_forward.1} parent=0 // pred_check
    _
  $region19: #{ecg_lstm_forward.1} parent=0 // pred_check_branch
    %20 = sbr.rel (0) target = $region21
  $region20: #{ecg_lstm_forward.1} parent=0 // pred_region
    _
  $region21: #{ecg_lstm_forward.1} parent=0 // pred_fallthru
    _
  // Predicated region
  $region22: #{ecg_lstm_forward.1} parent=0 // pred_check
    _
  $region23: #{ecg_lstm_forward.1} parent=0 // pred_check_branch
    %22 = sbr.rel (0) target = $region25
  $region24: #{ecg_lstm_forward.1} parent=0 // pred_region
    _
  $region25: #{ecg_lstm_forward.1} parent=0 // pred_fallthru
    _
  %v23 = vld [vmem:[%s1] sm:$0x1]
  %v24 = vld [vmem:[%s3] sm:$0xff]
  %v25 = vld [vmem:[%s3 + $0x8] sm:$0xff]
  %v26 = vld [vmem:[%s3 + $0x10] sm:$0xff]
  %v27 = vld [vmem:[%s3 + $0x18] sm:$0xff]
  %v28 = vld [vmem:[%s2] sm:$0x1]
  %v29 = vld [vmem:[%s0] sm:$0xff]
  %vm30 = vcmask 261120
  %v32 = vsel %vm30, 0.0, 0
  %34 = vmatprep.subr.mxu0 0.0
  %35 = vmatpush1.msra.mxu0 %v24
  %36 = vmatprep.subr.mxu0 0.0
  %37 = vmatpush1.msra.mxu0 %v25
  %38 = vmatprep.subr.mxu0 0.0
  %39 = vmatpush1.msra.mxu0 %v26
  %40 = vmatprep.subr.mxu0 0.0
  %41 = vmatpush1.msra.mxu0 %v27
  %42 = vmatprep.subr.mxu0 0.0
  %43 = vmatpush1.msra.mxu0 0.0
  %44 = vmatprep.subr.mxu0 0.0
  %45 = vmatpush1.msra.mxu0 0.0
  %46 = vmatprep.subr.mxu0 0.0
  %47 = vmatpush1.msra.mxu0 0.0
  %48 = vmatprep.subr.mxu0 0.0
  %49 = vmatpush1.msra.mxu0 0.0
  %50 = vmatprep.subr.mxu0 0.0
  %51 = vmatpush1.msra.mxu0 0.0
  %52 = vmatprep.subr.mxu0 0.0
  %53 = vmatpush1.msra.mxu0 0.0
  %54 = vmatprep.subr.mxu0 0.0
  %55 = vmatpush1.msra.mxu0 0.0
  %56 = vmatprep.subr.mxu0 0.0
  %57 = vmatpush1.msra.mxu0 0.0
  %58 = vmatprep.subr.mxu0 0.0
  %59 = vmatpush1.msra.mxu0 0.0
  %60 = vmatprep.subr.mxu0 0.0
  %61 = vmatpush1.msra.mxu0 0.0
  %62 = vmatprep.subr.mxu0 0.0
  %63 = vmatpush1.msra.mxu0 0.0
  %64 = vmatprep.subr.mxu0 0.0
  %65 = vmatpush1.msra.mxu0 0.0
  %66 = vmatprep.subr.mxu0 0.0
  %67 = vmatpush1.msra.mxu0 0.0
  %68 = vmatprep.subr.mxu0 0.0
  %69 = vmatpush1.msra.mxu0 0.0
  %70 = vmatprep.subr.mxu0 0.0
  %71 = vmatpush1.msra.mxu0 0.0
  %72 = vmatprep.subr.mxu0 0.0
  %73 = vmatpush1.msra.mxu0 0.0
  %74 = vmatprep.subr.mxu0 0.0
  %75 = vmatpush1.msra.mxu0 0.0
  %76 = vmatprep.subr.mxu0 0.0
  %77 = vmatpush1.msra.mxu0 0.0
  %78 = vmatprep.subr.mxu0 0.0
  %79 = vmatpush1.msra.mxu0 0.0
  %80 = vmatprep.subr.mxu0 0.0
  %81 = vmatpush1.msra.mxu0 0.0
  %82 = vmatprep.subr.mxu0 0.0
  %83 = vmatpush1.msra.mxu0 0.0
  %84 = vmatprep.subr.mxu0 0.0
  %85 = vmatpush1.msra.mxu0 0.0
  %86 = vmatprep.subr.mxu0 0.0
  %87 = vmatpush1.msra.mxu0 0.0
  %88 = vmatprep.subr.mxu0 0.0
  %89 = vmatpush1.msra.mxu0 0.0
  %90 = vmatprep.subr.mxu0 0.0
  %91 = vmatpush1.msra.mxu0 0.0
  %92 = vmatprep.subr.mxu0 0.0
  %93 = vmatpush1.msra.mxu0 0.0
  %94 = vmatprep.subr.mxu0 0.0
  %95 = vmatpush1.msra.mxu0 0.0
  %96 = vmatprep.subr.mxu0 0.0
  %97 = vmatpush1.msra.mxu0 0.0
  %98 = vmatprep.mubr.f32.mxu0 0.0
  %99 = vmatmul.mubr.f32.gmra.mrb[0].mxu0 %v32
  %v100 = vpop.f32.mrb[0].mxu0
  %v101 = vadd.f32 0.0, %v100
  %v102 = vpop.f32.mrb[0].mxu0
  %103 = vdwg.mxu0
  %vm104 = vcmask 7168
  %v106 = vsel %vm104, %v29, 0
  %vm108 = vcmask 1040384
  %v110 = vsel %vm108, %v23, 0
  %112 = vmatprep.subr.mxu0 0.0
  %113 = vmatpush1.msra.mxu0 %v110
  %114 = vmatprep.subr.mxu0 0.0
  %115 = vmatpush1.msra.mxu0 0.0
  %116 = vmatprep.subr.mxu0 0.0
  %117 = vmatpush1.msra.mxu0 0.0
  %118 = vmatprep.subr.mxu0 0.0
  %119 = vmatpush1.msra.mxu0 0.0
  %120 = vmatprep.subr.mxu0 0.0
  %121 = vmatpush1.msra.mxu0 0.0
  %122 = vmatprep.subr.mxu0 0.0
  %123 = vmatpush1.msra.mxu0 0.0
  %124 = vmatprep.subr.mxu0 0.0
  %125 = vmatpush1.msra.mxu0 0.0
  %126 = vmatprep.subr.mxu0 0.0
  %127 = vmatpush1.msra.mxu0 0.0
  %128 = vmatprep.subr.mxu0 0.0
  %129 = vmatpush1.msra.mxu0 0.0
  %130 = vmatprep.subr.mxu0 0.0
  %131 = vmatpush1.msra.mxu0 0.0
  %132 = vmatprep.subr.mxu0 0.0
  %133 = vmatpush1.msra.mxu0 0.0
  %134 = vmatprep.subr.mxu0 0.0
  %135 = vmatpush1.msra.mxu0 0.0
  %136 = vmatprep.subr.mxu0 0.0
  %137 = vmatpush1.msra.mxu0 0.0
  %138 = vmatprep.subr.mxu0 0.0
  %139 = vmatpush1.msra.mxu0 0.0
  %140 = vmatprep.subr.mxu0 0.0
  %141 = vmatpush1.msra.mxu0 0.0
  %142 = vmatprep.subr.mxu0 0.0
  %143 = vmatpush1.msra.mxu0 0.0
  %144 = vmatprep.subr.mxu0 0.0
  %145 = vmatpush1.msra.mxu0 0.0
  %146 = vmatprep.subr.mxu0 0.0
  %147 = vmatpush1.msra.mxu0 0.0
  %148 = vmatprep.subr.mxu0 0.0
  %149 = vmatpush1.msra.mxu0 0.0
  %150 = vmatprep.subr.mxu0 0.0
  %151 = vmatpush1.msra.mxu0 0.0
  %152 = vmatprep.subr.mxu0 0.0
  %153 = vmatpush1.msra.mxu0 0.0
  %154 = vmatprep.subr.mxu0 0.0
  %155 = vmatpush1.msra.mxu0 0.0
  %156 = vmatprep.subr.mxu0 0.0
  %157 = vmatpush1.msra.mxu0 0.0
  %158 = vmatprep.subr.mxu0 0.0
  %159 = vmatpush1.msra.mxu0 0.0
  %160 = vmatprep.subr.mxu0 0.0
  %161 = vmatpush1.msra.mxu0 0.0
  %162 = vmatprep.subr.mxu0 0.0
  %163 = vmatpush1.msra.mxu0 0.0
  %164 = vmatprep.subr.mxu0 0.0
  %165 = vmatpush1.msra.mxu0 0.0
  %166 = vmatprep.subr.mxu0 0.0
  %167 = vmatpush1.msra.mxu0 0.0
  %168 = vmatprep.subr.mxu0 0.0
  %169 = vmatpush1.msra.mxu0 0.0
  %170 = vmatprep.subr.mxu0 0.0
  %171 = vmatpush1.msra.mxu0 0.0
  %172 = vmatprep.subr.mxu0 0.0
  %173 = vmatpush1.msra.mxu0 0.0
  %174 = vmatprep.subr.mxu0 0.0
  %175 = vmatpush1.msra.mxu0 0.0
  %176 = vmatprep.mubr.f32.mxu0 0.0
  %177 = vmatmul.mubr.f32.gmra.mrb[0].mxu0 %v106
  %v178 = vpop.f32.mrb[0].mxu0
  %v179 = vadd.f32 %v101, %v178
  %v180 = vpop.f32.mrb[0].mxu0
  %181 = vdwg.mxu0
  %v183 = vlaneseq
  %v184 = vshrl.u32 %v183, 7
  %v185 = vsub.s32 0, %v184
  %v186 = vrot.slane %v28, %v185
  %v188 = vadd.f32 %v179, %v186
  %v189 = vxor.u32 %v188, 2147483648
  %v190 = vmul.f32 %v189, 1.442695
  %v191 = vpow.pop %v190
  %v192 = vadd.f32 %v191, 1.0
  %v193 = vrcp.pop %v192
  %v194 = vmul.f32 1.0, %v193
  %v195 = vtanh.pop %v188
  %v196 = vmul.f32 %v194, 0.0
  %198 = vrot.lane.b32.xlu0 %v195, 64
  %v199 = vpop.permute.xlu0 %198
  %v201 = vmul.f32 %v194, %v199
  %203 = vrot.lane.b32.xlu0 %v201, 32
  %v204 = vpop.permute.xlu0 %203
  %v206 = vadd.f32 %v196, %v204
  %v207 = vtanh.pop %v206
  %209 = vrot.lane.b32.xlu0 %v207, 64
  %v210 = vpop.permute.xlu0 %209
  %v212 = vmul.f32 %v194, %v210
  %s213 = scalar_lea.vmem %s0, 8
  %v214 = vld [vmem:[%s213] sm:$0xff]
  %216 = vrot.lane.b32.xlu0 %v212, 32
  %v217 = vpop.permute.xlu0 %216
  %v218 = vsel %vm30, %v217, 0
  %220 = vmatprep.subr.mxu0 0.0
  %221 = vmatpush1.msra.mxu0 %v24
  %222 = vmatprep.subr.mxu0 0.0
  %223 = vmatpush1.msra.mxu0 %v25
  %224 = vmatprep.subr.mxu0 0.0
  %225 = vmatpush1.msra.mxu0 %v26
  %226 = vmatprep.subr.mxu0 0.0
  %227 = vmatpush1.msra.mxu0 %v27
  %228 = vmatprep.subr.mxu0 0.0
  %229 = vmatpush1.msra.mxu0 0.0
  %230 = vmatprep.subr.mxu0 0.0
  %231 = vmatpush1.msra.mxu0 0.0
  %232 = vmatprep.subr.mxu0 0.0
  %233 = vmatpush1.msra.mxu0 0.0
  %234 = vmatprep.subr.mxu0 0.0
  %235 = vmatpush1.msra.mxu0 0.0
  %236 = vmatprep.subr.mxu0 0.0
  %237 = vmatpush1.msra.mxu0 0.0
  %238 = vmatprep.subr.mxu0 0.0
  %239 = vmatpush1.msra.mxu0 0.0
  %240 = vmatprep.subr.mxu0 0.0
  %241 = vmatpush1.msra.mxu0 0.0
  %242 = vmatprep.subr.mxu0 0.0
  %243 = vmatpush1.msra.mxu0 0.0
  %244 = vmatprep.subr.mxu0 0.0
  %245 = vmatpush1.msra.mxu0 0.0
  %246 = vmatprep.subr.mxu0 0.0
  %247 = vmatpush1.msra.mxu0 0.0
  %248 = vmatprep.subr.mxu0 0.0
  %249 = vmatpush1.msra.mxu0 0.0
  %250 = vmatprep.subr.mxu0 0.0
  %251 = vmatpush1.msra.mxu0 0.0
  %252 = vmatprep.subr.mxu0 0.0
  %253 = vmatpush1.msra.mxu0 0.0
  %254 = vmatprep.subr.mxu0 0.0
  %255 = vmatpush1.msra.mxu0 0.0
  %256 = vmatprep.subr.mxu0 0.0
  %257 = vmatpush1.msra.mxu0 0.0
  %258 = vmatprep.subr.mxu0 0.0
  %259 = vmatpush1.msra.mxu0 0.0
  %260 = vmatprep.subr.mxu0 0.0
  %261 = vmatpush1.msra.mxu0 0.0
  %262 = vmatprep.subr.mxu0 0.0
  %263 = vmatpush1.msra.mxu0 0.0
  %264 = vmatprep.subr.mxu0 0.0
  %265 = vmatpush1.msra.mxu0 0.0
  %266 = vmatprep.subr.mxu0 0.0
  %267 = vmatpush1.msra.mxu0 0.0
  %268 = vmatprep.subr.mxu0 0.0
  %269 = vmatpush1.msra.mxu0 0.0
  %270 = vmatprep.subr.mxu0 0.0
  %271 = vmatpush1.msra.mxu0 0.0
  %272 = vmatprep.subr.mxu0 0.0
  %273 = vmatpush1.msra.mxu0 0.0
  %274 = vmatprep.subr.mxu0 0.0
  %275 = vmatpush1.msra.mxu0 0.0
  %276 = vmatprep.subr.mxu0 0.0
  %277 = vmatpush1.msra.mxu0 0.0
  %278 = vmatprep.subr.mxu0 0.0
  %279 = vmatpush1.msra.mxu0 0.0
  %280 = vmatprep.subr.mxu0 0.0
  %281 = vmatpush1.msra.mxu0 0.0
  %282 = vmatprep.subr.mxu0 0.0
  %283 = vmatpush1.msra.mxu0 0.0
  %284 = vmatprep.mubr.f32.mxu0 0.0
  %285 = vmatmul.mubr.f32.gmra.mrb[0].mxu0 %v218
  %v286 = vpop.f32.mrb[0].mxu0
  %v287 = vadd.f32 0.0, %v286
  %v288 = vpop.f32.mrb[0].mxu0
  %289 = vdwg.mxu0
  %v291 = vsel %vm104, %v214, 0
  %293 = vmatprep.subr.mxu0 0.0
  %294 = vmatpush1.msra.mxu0 %v110
  %295 = vmatprep.subr.mxu0 0.0
  %296 = vmatpush1.msra.mxu0 0.0
  %297 = vmatprep.subr.mxu0 0.0
  %298 = vmatpush1.msra.mxu0 0.0
  %299 = vmatprep.subr.mxu0 0.0
  %300 = vmatpush1.msra.mxu0 0.0
  %301 = vmatprep.subr.mxu0 0.0
  %302 = vmatpush1.msra.mxu0 0.0
  %303 = vmatprep.subr.mxu0 0.0
  %304 = vmatpush1.msra.mxu0 0.0
  %305 = vmatprep.subr.mxu0 0.0
  %306 = vmatpush1.msra.mxu0 0.0
  %307 = vmatprep.subr.mxu0 0.0
  %308 = vmatpush1.msra.mxu0 0.0
  %309 = vmatprep.subr.mxu0 0.0
  %310 = vmatpush1.msra.mxu0 0.0
  %311 = vmatprep.subr.mxu0 0.0
  %312 = vmatpush1.msra.mxu0 0.0
  %313 = vmatprep.subr.mxu0 0.0
  %314 = vmatpush1.msra.mxu0 0.0
  %315 = vmatprep.subr.mxu0 0.0
  %316 = vmatpush1.msra.mxu0 0.0
  %317 = vmatprep.subr.mxu0 0.0
  %318 = vmatpush1.msra.mxu0 0.0
  %319 = vmatprep.subr.mxu0 0.0
  %320 = vmatpush1.msra.mxu0 0.0
  %321 = vmatprep.subr.mxu0 0.0
  %322 = vmatpush1.msra.mxu0 0.0
  %323 = vmatprep.subr.mxu0 0.0
  %324 = vmatpush1.msra.mxu0 0.0
  %325 = vmatprep.subr.mxu0 0.0
  %326 = vmatpush1.msra.mxu0 0.0
  %327 = vmatprep.subr.mxu0 0.0
  %328 = vmatpush1.msra.mxu0 0.0
  %329 = vmatprep.subr.mxu0 0.0
  %330 = vmatpush1.msra.mxu0 0.0
  %331 = vmatprep.subr.mxu0 0.0
  %332 = vmatpush1.msra.mxu0 0.0
  %333 = vmatprep.subr.mxu0 0.0
  %334 = vmatpush1.msra.mxu0 0.0
  %335 = vmatprep.subr.mxu0 0.0
  %336 = vmatpush1.msra.mxu0 0.0
  %337 = vmatprep.subr.mxu0 0.0
  %338 = vmatpush1.msra.mxu0 0.0
  %339 = vmatprep.subr.mxu0 0.0
  %340 = vmatpush1.msra.mxu0 0.0
  %341 = vmatprep.subr.mxu0 0.0
  %342 = vmatpush1.msra.mxu0 0.0
  %343 = vmatprep.subr.mxu0 0.0
  %344 = vmatpush1.msra.mxu0 0.0
  %345 = vmatprep.subr.mxu0 0.0
  %346 = vmatpush1.msra.mxu0 0.0
  %347 = vmatprep.subr.mxu0 0.0
  %348 = vmatpush1.msra.mxu0 0.0
  %349 = vmatprep.subr.mxu0 0.0
  %350 = vmatpush1.msra.mxu0 0.0
  %351 = vmatprep.subr.mxu0 0.0
  %352 = vmatpush1.msra.mxu0 0.0
  %353 = vmatprep.subr.mxu0 0.0
  %354 = vmatpush1.msra.mxu0 0.0
  %355 = vmatprep.subr.mxu0 0.0
  %356 = vmatpush1.msra.mxu0 0.0
  %357 = vmatprep.mubr.f32.mxu0 0.0
  %358 = vmatmul.mubr.f32.gmra.mrb[0].mxu0 %v291
  %v359 = vpop.f32.mrb[0].mxu0
  %v360 = vadd.f32 %v287, %v359
  %v361 = vpop.f32.mrb[0].mxu0
  %362 = vdwg.mxu0
  %v363 = vadd.f32 %v360, %v186
  %v364 = vxor.u32 %v363, 2147483648
  %v365 = vmul.f32 %v364, 1.442695
  %v366 = vpow.pop %v365
  %v367 = vadd.f32 %v366, 1.0
  %v368 = vrcp.pop %v367
  %v369 = vmul.f32 1.0, %v368
  %v370 = vtanh.pop %v363
  %v371 = vmul.f32 %v369, %v206
  %373 = vrot.lane.b32.xlu0 %v370, 64
  %v374 = vpop.permute.xlu0 %373
  %v376 = vmul.f32 %v369, %v374
  %378 = vrot.lane.b32.xlu0 %v376, 32
  %v379 = vpop.permute.xlu0 %378
  %v381 = vadd.f32 %v371, %v379
  %v382 = vtanh.pop %v381
  %384 = vrot.lane.b32.xlu0 %v382, 64
  %v385 = vpop.permute.xlu0 %384
  %v387 = vmul.f32 %v369, %v385
  %s388 = scalar_lea.vmem %s0, 16
  %v389 = vld [vmem:[%s388] sm:$0xff]
  %391 = vrot.lane.b32.xlu0 %v387, 32
  %v392 = vpop.permute.xlu0 %391
  %v393 = vsel %vm30, %v392, 0
  %395 = vmatprep.subr.mxu0 0.0
  %396 = vmatpush1.msra.mxu0 %v24
  %397 = vmatprep.subr.mxu0 0.0
  %398 = vmatpush1.msra.mxu0 %v25
  %399 = vmatprep.subr.mxu0 0.0
  %400 = vmatpush1.msra.mxu0 %v26
  %401 = vmatprep.subr.mxu0 0.0
  %402 = vmatpush1.msra.mxu0 %v27
  %403 = vmatprep.subr.mxu0 0.0
  %404 = vmatpush1.msra.mxu0 0.0
  %405 = vmatprep.subr.mxu0 0.0
  %406 = vmatpush1.msra.mxu0 0.0
  %407 = vmatprep.subr.mxu0 0.0
  %408 = vmatpush1.msra.mxu0 0.0
  %409 = vmatprep.subr.mxu0 0.0
  %410 = vmatpush1.msra.mxu0 0.0
  %411 = vmatprep.subr.mxu0 0.0
  %412 = vmatpush1.msra.mxu0 0.0
  %413 = vmatprep.subr.mxu0 0.0
  %414 = vmatpush1.msra.mxu0 0.0
  %415 = vmatprep.subr.mxu0 0.0
  %416 = vmatpush1.msra.mxu0 0.0
  %417 = vmatprep.subr.mxu0 0.0
  %418 = vmatpush1.msra.mxu0 0.0
  %419 = vmatprep.subr.mxu0 0.0
  %420 = vmatpush1.msra.mxu0 0.0
  %421 = vmatprep.subr.mxu0 0.0
  %422 = vmatpush1.msra.mxu0 0.0
  %423 = vmatprep.subr.mxu0 0.0
  %424 = vmatpush1.msra.mxu0 0.0
  %425 = vmatprep.subr.mxu0 0.0
  %426 = vmatpush1.msra.mxu0 0.0
  %427 = vmatprep.subr.mxu0 0.0
  %428 = vmatpush1.msra.mxu0 0.0
  %429 = vmatprep.subr.mxu0 0.0
  %430 = vmatpush1.msra.mxu0 0.0
  %431 = vmatprep.subr.mxu0 0.0
  %432 = vmatpush1.msra.mxu0 0.0
  %433 = vmatprep.subr.mxu0 0.0
  %434 = vmatpush1.msra.mxu0 0.0
  %435 = vmatprep.subr.mxu0 0.0
  %436 = vmatpush1.msra.mxu0 0.0
  %437 = vmatprep.subr.mxu0 0.0
  %438 = vmatpush1.msra.mxu0 0.0
  %439 = vmatprep.subr.mxu0 0.0
  %440 = vmatpush1.msra.mxu0 0.0
  %441 = vmatprep.subr.mxu0 0.0
  %442 = vmatpush1.msra.mxu0 0.0
  %443 = vmatprep.subr.mxu0 0.0
  %444 = vmatpush1.msra.mxu0 0.0
  %445 = vmatprep.subr.mxu0 0.0
  %446 = vmatpush1.msra.mxu0 0.0
  %447 = vmatprep.subr.mxu0 0.0
  %448 = vmatpush1.msra.mxu0 0.0
  %449 = vmatprep.subr.mxu0 0.0
  %450 = vmatpush1.msra.mxu0 0.0
  %451 = vmatprep.subr.mxu0 0.0
  %452 = vmatpush1.msra.mxu0 0.0
  %453 = vmatprep.subr.mxu0 0.0
  %454 = vmatpush1.msra.mxu0 0.0
  %455 = vmatprep.subr.mxu0 0.0
  %456 = vmatpush1.msra.mxu0 0.0
  %457 = vmatprep.subr.mxu0 0.0
  %458 = vmatpush1.msra.mxu0 0.0
  %459 = vmatprep.mubr.f32.mxu0 0.0
  %460 = vmatmul.mubr.f32.gmra.mrb[0].mxu0 %v393
  %v461 = vpop.f32.mrb[0].mxu0
  %v462 = vadd.f32 0.0, %v461
  %v463 = vpop.f32.mrb[0].mxu0
  %464 = vdwg.mxu0
  %v466 = vsel %vm104, %v389, 0
  %468 = vmatprep.subr.mxu0 0.0
  %469 = vmatpush1.msra.mxu0 %v110
  %470 = vmatprep.subr.mxu0 0.0
  %471 = vmatpush1.msra.mxu0 0.0
  %472 = vmatprep.subr.mxu0 0.0
  %473 = vmatpush1.msra.mxu0 0.0
  %474 = vmatprep.subr.mxu0 0.0
  %475 = vmatpush1.msra.mxu0 0.0
  %476 = vmatprep.subr.mxu0 0.0
  %477 = vmatpush1.msra.mxu0 0.0
  %478 = vmatprep.subr.mxu0 0.0
  %479 = vmatpush1.msra.mxu0 0.0
  %480 = vmatprep.subr.mxu0 0.0
  %481 = vmatpush1.msra.mxu0 0.0
  %482 = vmatprep.subr.mxu0 0.0
  %483 = vmatpush1.msra.mxu0 0.0
  %484 = vmatprep.subr.mxu0 0.0
  %485 = vmatpush1.msra.mxu0 0.0
  %486 = vmatprep.subr.mxu0 0.0
  %487 = vmatpush1.msra.mxu0 0.0
  %488 = vmatprep.subr.mxu0 0.0
  %489 = vmatpush1.msra.mxu0 0.0
  %490 = vmatprep.subr.mxu0 0.0
  %491 = vmatpush1.msra.mxu0 0.0
  %492 = vmatprep.subr.mxu0 0.0
  %493 = vmatpush1.msra.mxu0 0.0
  %494 = vmatprep.subr.mxu0 0.0
  %495 = vmatpush1.msra.mxu0 0.0
  %496 = vmatprep.subr.mxu0 0.0
  %497 = vmatpush1.msra.mxu0 0.0
  %498 = vmatprep.subr.mxu0 0.0
  %499 = vmatpush1.msra.mxu0 0.0
  %500 = vmatprep.subr.mxu0 0.0
  %501 = vmatpush1.msra.mxu0 0.0
  %502 = vmatprep.subr.mxu0 0.0
  %503 = vmatpush1.msra.mxu0 0.0
  %504 = vmatprep.subr.mxu0 0.0
  %505 = vmatpush1.msra.mxu0 0.0
  %506 = vmatprep.subr.mxu0 0.0
  %507 = vmatpush1.msra.mxu0 0.0
  %508 = vmatprep.subr.mxu0 0.0
  %509 = vmatpush1.msra.mxu0 0.0
  %510 = vmatprep.subr.mxu0 0.0
  %511 = vmatpush1.msra.mxu0 0.0
  %512 = vmatprep.subr.mxu0 0.0
  %513 = vmatpush1.msra.mxu0 0.0
  %514 = vmatprep.subr.mxu0 0.0
  %515 = vmatpush1.msra.mxu0 0.0
  %516 = vmatprep.subr.mxu0 0.0
  %517 = vmatpush1.msra.mxu0 0.0
  %518 = vmatprep.subr.mxu0 0.0
  %519 = vmatpush1.msra.mxu0 0.0
  %520 = vmatprep.subr.mxu0 0.0
  %521 = vmatpush1.msra.mxu0 0.0
  %522 = vmatprep.subr.mxu0 0.0
  %523 = vmatpush1.msra.mxu0 0.0
  %524 = vmatprep.subr.mxu0 0.0
  %525 = vmatpush1.msra.mxu0 0.0
  %526 = vmatprep.subr.mxu0 0.0
  %527 = vmatpush1.msra.mxu0 0.0
  %528 = vmatprep.subr.mxu0 0.0
  %529 = vmatpush1.msra.mxu0 0.0
  %530 = vmatprep.subr.mxu0 0.0
  %531 = vmatpush1.msra.mxu0 0.0
  %532 = vmatprep.mubr.f32.mxu0 0.0
  %533 = vmatmul.mubr.f32.gmra.mrb[0].mxu0 %v466
  %v534 = vpop.f32.mrb[0].mxu0
  %v535 = vadd.f32 %v462, %v534
  %v536 = vpop.f32.mrb[0].mxu0
  %537 = vdwg.mxu0
  %v538 = vadd.f32 %v535, %v186
  %v539 = vxor.u32 %v538, 2147483648
  %v540 = vmul.f32 %v539, 1.442695
  %v541 = vpow.pop %v540
  %v542 = vadd.f32 %v541, 1.0
  %v543 = vrcp.pop %v542
  %v544 = vmul.f32 1.0, %v543
  %v545 = vtanh.pop %v538
  %v546 = vmul.f32 %v544, %v381
  %548 = vrot.lane.b32.xlu0 %v545, 64
  %v549 = vpop.permute.xlu0 %548
  %v551 = vmul.f32 %v544, %v549
  %553 = vrot.lane.b32.xlu0 %v551, 32
  %v554 = vpop.permute.xlu0 %553
  %v556 = vadd.f32 %v546, %v554
  %v557 = vtanh.pop %v556
  %559 = vrot.lane.b32.xlu0 %v557, 64
  %v560 = vpop.permute.xlu0 %559
  %v562 = vmul.f32 %v544, %v560
  %s563 = scalar_lea.vmem %s0, 24
  %v564 = vld [vmem:[%s563] sm:$0xff]
  %566 = vrot.lane.b32.xlu0 %v562, 32
  %v567 = vpop.permute.xlu0 %566
  %v568 = vsel %vm30, %v567, 0
  %570 = vmatprep.subr.mxu0 0.0
  %571 = vmatpush1.msra.mxu0 %v24
  %572 = vmatprep.subr.mxu0 0.0
  %573 = vmatpush1.msra.mxu0 %v25
  %574 = vmatprep.subr.mxu0 0.0
  %575 = vmatpush1.msra.mxu0 %v26
  %576 = vmatprep.subr.mxu0 0.0
  %577 = vmatpush1.msra.mxu0 %v27
  %578 = vmatprep.subr.mxu0 0.0
  %579 = vmatpush1.msra.mxu0 0.0
  %580 = vmatprep.subr.mxu0 0.0
  %581 = vmatpush1.msra.mxu0 0.0
  %582 = vmatprep.subr.mxu0 0.0
  %583 = vmatpush1.msra.mxu0 0.0
  %584 = vmatprep.subr.mxu0 0.0
  %585 = vmatpush1.msra.mxu0 0.0
  %586 = vmatprep.subr.mxu0 0.0
  %587 = vmatpush1.msra.mxu0 0.0
  %588 = vmatprep.subr.mxu0 0.0
  %589 = vmatpush1.msra.mxu0 0.0
  %590 = vmatprep.subr.mxu0 0.0
  %591 = vmatpush1.msra.mxu0 0.0
  %592 = vmatprep.subr.mxu0 0.0
  %593 = vmatpush1.msra.mxu0 0.0
  %594 = vmatprep.subr.mxu0 0.0
  %595 = vmatpush1.msra.mxu0 0.0
  %596 = vmatprep.subr.mxu0 0.0
  %597 = vmatpush1.msra.mxu0 0.0
  %598 = vmatprep.subr.mxu0 0.0
  %599 = vmatpush1.msra.mxu0 0.0
  %600 = vmatprep.subr.mxu0 0.0
  %601 = vmatpush1.msra.mxu0 0.0
  %602 = vmatprep.subr.mxu0 0.0
  %603 = vmatpush1.msra.mxu0 0.0
  %604 = vmatprep.subr.mxu0 0.0
  %605 = vmatpush1.msra.mxu0 0.0
  %606 = vmatprep.subr.mxu0 0.0
  %607 = vmatpush1.msra.mxu0 0.0
  %608 = vmatprep.subr.mxu0 0.0
  %609 = vmatpush1.msra.mxu0 0.0
  %610 = vmatprep.subr.mxu0 0.0
  %611 = vmatpush1.msra.mxu0 0.0
  %612 = vmatprep.subr.mxu0 0.0
  %613 = vmatpush1.msra.mxu0 0.0
  %614 = vmatprep.subr.mxu0 0.0
  %615 = vmatpush1.msra.mxu0 0.0
  %616 = vmatprep.subr.mxu0 0.0
  %617 = vmatpush1.msra.mxu0 0.0
  %618 = vmatprep.subr.mxu0 0.0
  %619 = vmatpush1.msra.mxu0 0.0
  %620 = vmatprep.subr.mxu0 0.0
  %621 = vmatpush1.msra.mxu0 0.0
  %622 = vmatprep.subr.mxu0 0.0
  %623 = vmatpush1.msra.mxu0 0.0
  %624 = vmatprep.subr.mxu0 0.0
  %625 = vmatpush1.msra.mxu0 0.0
  %626 = vmatprep.subr.mxu0 0.0
  %627 = vmatpush1.msra.mxu0 0.0
  %628 = vmatprep.subr.mxu0 0.0
  %629 = vmatpush1.msra.mxu0 0.0
  %630 = vmatprep.subr.mxu0 0.0
  %631 = vmatpush1.msra.mxu0 0.0
  %632 = vmatprep.subr.mxu0 0.0
  %633 = vmatpush1.msra.mxu0 0.0
  %634 = vmatprep.mubr.f32.mxu0 0.0
  %635 = vmatmul.mubr.f32.gmra.mrb[0].mxu0 %v568
  %v636 = vpop.f32.mrb[0].mxu0
  %v637 = vadd.f32 0.0, %v636
  %v638 = vpop.f32.mrb[0].mxu0
  %639 = vdwg.mxu0
  %v641 = vsel %vm104, %v564, 0
  %643 = vmatprep.subr.mxu0 0.0
  %644 = vmatpush1.msra.mxu0 %v110
  %645 = vmatprep.subr.mxu0 0.0
  %646 = vmatpush1.msra.mxu0 0.0
  %647 = vmatprep.subr.mxu0 0.0
  %648 = vmatpush1.msra.mxu0 0.0
  %649 = vmatprep.subr.mxu0 0.0
  %650 = vmatpush1.msra.mxu0 0.0
  %651 = vmatprep.subr.mxu0 0.0
  %652 = vmatpush1.msra.mxu0 0.0
  %653 = vmatprep.subr.mxu0 0.0
  %654 = vmatpush1.msra.mxu0 0.0
  %655 = vmatprep.subr.mxu0 0.0
  %656 = vmatpush1.msra.mxu0 0.0
  %657 = vmatprep.subr.mxu0 0.0
  %658 = vmatpush1.msra.mxu0 0.0
  %659 = vmatprep.subr.mxu0 0.0
  %660 = vmatpush1.msra.mxu0 0.0
  %661 = vmatprep.subr.mxu0 0.0
  %662 = vmatpush1.msra.mxu0 0.0
  %663 = vmatprep.subr.mxu0 0.0
  %664 = vmatpush1.msra.mxu0 0.0
  %665 = vmatprep.subr.mxu0 0.0
  %666 = vmatpush1.msra.mxu0 0.0
  %667 = vmatprep.subr.mxu0 0.0
  %668 = vmatpush1.msra.mxu0 0.0
  %669 = vmatprep.subr.mxu0 0.0
  %670 = vmatpush1.msra.mxu0 0.0
  %671 = vmatprep.subr.mxu0 0.0
  %672 = vmatpush1.msra.mxu0 0.0
  %673 = vmatprep.subr.mxu0 0.0
  %674 = vmatpush1.msra.mxu0 0.0
  %675 = vmatprep.subr.mxu0 0.0
  %676 = vmatpush1.msra.mxu0 0.0
  %677 = vmatprep.subr.mxu0 0.0
  %678 = vmatpush1.msra.mxu0 0.0
  %679 = vmatprep.subr.mxu0 0.0
  %680 = vmatpush1.msra.mxu0 0.0
  %681 = vmatprep.subr.mxu0 0.0
  %682 = vmatpush1.msra.mxu0 0.0
  %683 = vmatprep.subr.mxu0 0.0
  %684 = vmatpush1.msra.mxu0 0.0
  %685 = vmatprep.subr.mxu0 0.0
  %686 = vmatpush1.msra.mxu0 0.0
  %687 = vmatprep.subr.mxu0 0.0
  %688 = vmatpush1.msra.mxu0 0.0
  %689 = vmatprep.subr.mxu0 0.0
  %690 = vmatpush1.msra.mxu0 0.0
  %691 = vmatprep.subr.mxu0 0.0
  %692 = vmatpush1.msra.mxu0 0.0
  %693 = vmatprep.subr.mxu0 0.0
  %694 = vmatpush1.msra.mxu0 0.0
  %695 = vmatprep.subr.mxu0 0.0
  %696 = vmatpush1.msra.mxu0 0.0
  %697 = vmatprep.subr.mxu0 0.0
  %698 = vmatpush1.msra.mxu0 0.0
  %699 = vmatprep.subr.mxu0 0.0
  %700 = vmatpush1.msra.mxu0 0.0
  %701 = vmatprep.subr.mxu0 0.0
  %702 = vmatpush1.msra.mxu0 0.0
  %703 = vmatprep.subr.mxu0 0.0
  %704 = vmatpush1.msra.mxu0 0.0
  %705 = vmatprep.subr.mxu0 0.0
  %706 = vmatpush1.msra.mxu0 0.0
  %707 = vmatprep.mubr.f32.mxu0 0.0
  %708 = vmatmul.mubr.f32.gmra.mrb[0].mxu0 %v641
  %v709 = vpop.f32.mrb[0].mxu0
  %v710 = vadd.f32 %v637, %v709
  %v711 = vpop.f32.mrb[0].mxu0
  %712 = vdwg.mxu0
  %v713 = vadd.f32 %v710, %v186
  %v714 = vxor.u32 %v713, 2147483648
  %v715 = vmul.f32 %v714, 1.442695
  %v716 = vpow.pop %v715
  %v717 = vadd.f32 %v716, 1.0
  %v718 = vrcp.pop %v717
  %v719 = vmul.f32 1.0, %v718
  %v720 = vtanh.pop %v713
  %v721 = vmul.f32 %v719, %v556
  %723 = vrot.lane.b32.xlu0 %v720, 64
  %v724 = vpop.permute.xlu0 %723
  %v726 = vmul.f32 %v719, %v724
  %728 = vrot.lane.b32.xlu0 %v726, 32
  %v729 = vpop.permute.xlu0 %728
  %v731 = vadd.f32 %v721, %v729
  %v732 = vtanh.pop %v731
  %734 = vrot.lane.b32.xlu0 %v732, 64
  %v735 = vpop.permute.xlu0 %734
  %v737 = vmul.f32 %v719, %v735
  %s738 = scalar_lea.vmem %s0, 32
  %v739 = vld [vmem:[%s738] sm:$0xff]
  %741 = vrot.lane.b32.xlu0 %v737, 32
  %v742 = vpop.permute.xlu0 %741
  %v743 = vsel %vm30, %v742, 0
  %745 = vmatprep.subr.mxu0 0.0
  %746 = vmatpush1.msra.mxu0 %v24
  %747 = vmatprep.subr.mxu0 0.0
  %748 = vmatpush1.msra.mxu0 %v25
  %749 = vmatprep.subr.mxu0 0.0
  %750 = vmatpush1.msra.mxu0 %v26
  %751 = vmatprep.subr.mxu0 0.0
  %752 = vmatpush1.msra.mxu0 %v27
  %753 = vmatprep.subr.mxu0 0.0
  %754 = vmatpush1.msra.mxu0 0.0
  %755 = vmatprep.subr.mxu0 0.0
  %756 = vmatpush1.msra.mxu0 0.0
  %757 = vmatprep.subr.mxu0 0.0
  %758 = vmatpush1.msra.mxu0 0.0
  %759 = vmatprep.subr.mxu0 0.0
  %760 = vmatpush1.msra.mxu0 0.0
  %761 = vmatprep.subr.mxu0 0.0
  %762 = vmatpush1.msra.mxu0 0.0
  %763 = vmatprep.subr.mxu0 0.0
  %764 = vmatpush1.msra.mxu0 0.0
  %765 = vmatprep.subr.mxu0 0.0
  %766 = vmatpush1.msra.mxu0 0.0
  %767 = vmatprep.subr.mxu0 0.0
  %768 = vmatpush1.msra.mxu0 0.0
  %769 = vmatprep.subr.mxu0 0.0
  %770 = vmatpush1.msra.mxu0 0.0
  %771 = vmatprep.subr.mxu0 0.0
  %772 = vmatpush1.msra.mxu0 0.0
  %773 = vmatprep.subr.mxu0 0.0
  %774 = vmatpush1.msra.mxu0 0.0
  %775 = vmatprep.subr.mxu0 0.0
  %776 = vmatpush1.msra.mxu0 0.0
  %777 = vmatprep.subr.mxu0 0.0
  %778 = vmatpush1.msra.mxu0 0.0
  %779 = vmatprep.subr.mxu0 0.0
  %780 = vmatpush1.msra.mxu0 0.0
  %781 = vmatprep.subr.mxu0 0.0
  %782 = vmatpush1.msra.mxu0 0.0
  %783 = vmatprep.subr.mxu0 0.0
  %784 = vmatpush1.msra.mxu0 0.0
  %785 = vmatprep.subr.mxu0 0.0
  %786 = vmatpush1.msra.mxu0 0.0
  %787 = vmatprep.subr.mxu0 0.0
  %788 = vmatpush1.msra.mxu0 0.0
  %789 = vmatprep.subr.mxu0 0.0
  %790 = vmatpush1.msra.mxu0 0.0
  %791 = vmatprep.subr.mxu0 0.0
  %792 = vmatpush1.msra.mxu0 0.0
  %793 = vmatprep.subr.mxu0 0.0
  %794 = vmatpush1.msra.mxu0 0.0
  %795 = vmatprep.subr.mxu0 0.0
  %796 = vmatpush1.msra.mxu0 0.0
  %797 = vmatprep.subr.mxu0 0.0
  %798 = vmatpush1.msra.mxu0 0.0
  %799 = vmatprep.subr.mxu0 0.0
  %800 = vmatpush1.msra.mxu0 0.0
  %801 = vmatprep.subr.mxu0 0.0
  %802 = vmatpush1.msra.mxu0 0.0
  %803 = vmatprep.subr.mxu0 0.0
  %804 = vmatpush1.msra.mxu0 0.0
  %805 = vmatprep.subr.mxu0 0.0
  %806 = vmatpush1.msra.mxu0 0.0
  %807 = vmatprep.subr.mxu0 0.0
  %808 = vmatpush1.msra.mxu0 0.0
  %809 = vmatprep.mubr.f32.mxu0 0.0
  %810 = vmatmul.mubr.f32.gmra.mrb[0].mxu0 %v743
  %v811 = vpop.f32.mrb[0].mxu0
  %v812 = vadd.f32 0.0, %v811
  %v813 = vpop.f32.mrb[0].mxu0
  %814 = vdwg.mxu0
  %v816 = vsel %vm104, %v739, 0
  %818 = vmatprep.subr.mxu0 0.0
  %819 = vmatpush1.msra.mxu0 %v110
  %820 = vmatprep.subr.mxu0 0.0
  %821 = vmatpush1.msra.mxu0 0.0
  %822 = vmatprep.subr.mxu0 0.0
  %823 = vmatpush1.msra.mxu0 0.0
  %824 = vmatprep.subr.mxu0 0.0
  %825 = vmatpush1.msra.mxu0 0.0
  %826 = vmatprep.subr.mxu0 0.0
  %827 = vmatpush1.msra.mxu0 0.0
  %828 = vmatprep.subr.mxu0 0.0
  %829 = vmatpush1.msra.mxu0 0.0
  %830 = vmatprep.subr.mxu0 0.0
  %831 = vmatpush1.msra.mxu0 0.0
  %832 = vmatprep.subr.mxu0 0.0
  %833 = vmatpush1.msra.mxu0 0.0
  %834 = vmatprep.subr.mxu0 0.0
  %835 = vmatpush1.msra.mxu0 0.0
  %836 = vmatprep.subr.mxu0 0.0
  %837 = vmatpush1.msra.mxu0 0.0
  %838 = vmatprep.subr.mxu0 0.0
  %839 = vmatpush1.msra.mxu0 0.0
  %840 = vmatprep.subr.mxu0 0.0
  %841 = vmatpush1.msra.mxu0 0.0
  %842 = vmatprep.subr.mxu0 0.0
  %843 = vmatpush1.msra.mxu0 0.0
  %844 = vmatprep.subr.mxu0 0.0
  %845 = vmatpush1.msra.mxu0 0.0
  %846 = vmatprep.subr.mxu0 0.0
  %847 = vmatpush1.msra.mxu0 0.0
  %848 = vmatprep.subr.mxu0 0.0
  %849 = vmatpush1.msra.mxu0 0.0
  %850 = vmatprep.subr.mxu0 0.0
  %851 = vmatpush1.msra.mxu0 0.0
  %852 = vmatprep.subr.mxu0 0.0
  %853 = vmatpush1.msra.mxu0 0.0
  %854 = vmatprep.subr.mxu0 0.0
  %855 = vmatpush1.msra.mxu0 0.0
  %856 = vmatprep.subr.mxu0 0.0
  %857 = vmatpush1.msra.mxu0 0.0
  %858 = vmatprep.subr.mxu0 0.0
  %859 = vmatpush1.msra.mxu0 0.0
  %860 = vmatprep.subr.mxu0 0.0
  %861 = vmatpush1.msra.mxu0 0.0
  %862 = vmatprep.subr.mxu0 0.0
  %863 = vmatpush1.msra.mxu0 0.0
  %864 = vmatprep.subr.mxu0 0.0
  %865 = vmatpush1.msra.mxu0 0.0
  %866 = vmatprep.subr.mxu0 0.0
  %867 = vmatpush1.msra.mxu0 0.0
  %868 = vmatprep.subr.mxu0 0.0
  %869 = vmatpush1.msra.mxu0 0.0
  %870 = vmatprep.subr.mxu0 0.0
  %871 = vmatpush1.msra.mxu0 0.0
  %872 = vmatprep.subr.mxu0 0.0
  %873 = vmatpush1.msra.mxu0 0.0
  %874 = vmatprep.subr.mxu0 0.0
  %875 = vmatpush1.msra.mxu0 0.0
  %876 = vmatprep.subr.mxu0 0.0
  %877 = vmatpush1.msra.mxu0 0.0
  %878 = vmatprep.subr.mxu0 0.0
  %879 = vmatpush1.msra.mxu0 0.0
  %880 = vmatprep.subr.mxu0 0.0
  %881 = vmatpush1.msra.mxu0 0.0
  %882 = vmatprep.mubr.f32.mxu0 0.0
  %883 = vmatmul.mubr.f32.gmra.mrb[0].mxu0 %v816
  %v884 = vpop.f32.mrb[0].mxu0
  %v885 = vadd.f32 %v812, %v884
  %v886 = vpop.f32.mrb[0].mxu0
  %887 = vdwg.mxu0
  %v888 = vadd.f32 %v885, %v186
  %v889 = vxor.u32 %v888, 2147483648
  %v890 = vmul.f32 %v889, 1.442695
  %v891 = vpow.pop %v890
  %v892 = vadd.f32 %v891, 1.0
  %v893 = vrcp.pop %v892
  %v894 = vmul.f32 1.0, %v893
  %v895 = vtanh.pop %v888
  %v896 = vmul.f32 %v894, %v731
  %898 = vrot.lane.b32.xlu0 %v895, 64
  %v899 = vpop.permute.xlu0 %898
  %v901 = vmul.f32 %v894, %v899
  %903 = vrot.lane.b32.xlu0 %v901, 32
  %v904 = vpop.permute.xlu0 %903
  %v906 = vadd.f32 %v896, %v904
  %v907 = vtanh.pop %v906
  %909 = vrot.lane.b32.xlu0 %v907, 64
  %v910 = vpop.permute.xlu0 %909
  %v912 = vmul.f32 %v894, %v910
  %s913 = scalar_lea.vmem %s0, 40
  %v914 = vld [vmem:[%s913] sm:$0xff]
  %916 = vrot.lane.b32.xlu0 %v912, 32
  %v917 = vpop.permute.xlu0 %916
  %v918 = vsel %vm30, %v917, 0
  %920 = vmatprep.subr.mxu0 0.0
  %921 = vmatpush1.msra.mxu0 %v24
  %922 = vmatprep.subr.mxu0 0.0
  %923 = vmatpush1.msra.mxu0 %v25
  %924 = vmatprep.subr.mxu0 0.0
  %925 = vmatpush1.msra.mxu0 %v26
  %926 = vmatprep.subr.mxu0 0.0
  %927 = vmatpush1.msra.mxu0 %v27
  %928 = vmatprep.subr.mxu0 0.0
  %929 = vmatpush1.msra.mxu0 0.0
  %930 = vmatprep.subr.mxu0 0.0
  %931 = vmatpush1.msra.mxu0 0.0
  %932 = vmatprep.subr.mxu0 0.0
  %933 = vmatpush1.msra.mxu0 0.0
  %934 = vmatprep.subr.mxu0 0.0
  %935 = vmatpush1.msra.mxu0 0.0
  %936 = vmatprep.subr.mxu0 0.0
  %937 = vmatpush1.msra.mxu0 0.0
  %938 = vmatprep.subr.mxu0 0.0
  %939 = vmatpush1.msra.mxu0 0.0
  %940 = vmatprep.subr.mxu0 0.0
  %941 = vmatpush1.msra.mxu0 0.0
  %942 = vmatprep.subr.mxu0 0.0
  %943 = vmatpush1.msra.mxu0 0.0
  %944 = vmatprep.subr.mxu0 0.0
  %945 = vmatpush1.msra.mxu0 0.0
  %946 = vmatprep.subr.mxu0 0.0
  %947 = vmatpush1.msra.mxu0 0.0
  %948 = vmatprep.subr.mxu0 0.0
  %949 = vmatpush1.msra.mxu0 0.0
  %950 = vmatprep.subr.mxu0 0.0
  %951 = vmatpush1.msra.mxu0 0.0
  %952 = vmatprep.subr.mxu0 0.0
  %953 = vmatpush1.msra.mxu0 0.0
  %954 = vmatprep.subr.mxu0 0.0
  %955 = vmatpush1.msra.mxu0 0.0
  %956 = vmatprep.subr.mxu0 0.0
  %957 = vmatpush1.msra.mxu0 0.0
  %958 = vmatprep.subr.mxu0 0.0
  %959 = vmatpush1.msra.mxu0 0.0
  %960 = vmatprep.subr.mxu0 0.0
  %961 = vmatpush1.msra.mxu0 0.0
  %962 = vmatprep.subr.mxu0 0.0
  %963 = vmatpush1.msra.mxu0 0.0
  %964 = vmatprep.subr.mxu0 0.0
  %965 = vmatpush1.msra.mxu0 0.0
  %966 = vmatprep.subr.mxu0 0.0
  %967 = vmatpush1.msra.mxu0 0.0
  %968 = vmatprep.subr.mxu0 0.0
  %969 = vmatpush1.msra.mxu0 0.0
  %970 = vmatprep.subr.mxu0 0.0
  %971 = vmatpush1.msra.mxu0 0.0
  %972 = vmatprep.subr.mxu0 0.0
  %973 = vmatpush1.msra.mxu0 0.0
  %974 = vmatprep.subr.mxu0 0.0
  %975 = vmatpush1.msra.mxu0 0.0
  %976 = vmatprep.subr.mxu0 0.0
  %977 = vmatpush1.msra.mxu0 0.0
  %978 = vmatprep.subr.mxu0 0.0
  %979 = vmatpush1.msra.mxu0 0.0
  %980 = vmatprep.subr.mxu0 0.0
  %981 = vmatpush1.msra.mxu0 0.0
  %982 = vmatprep.subr.mxu0 0.0
  %983 = vmatpush1.msra.mxu0 0.0
  %984 = vmatprep.mubr.f32.mxu0 0.0
  %985 = vmatmul.mubr.f32.gmra.mrb[0].mxu0 %v918
  %v986 = vpop.f32.mrb[0].mxu0
  %v987 = vadd.f32 0.0, %v986
  %v988 = vpop.f32.mrb[0].mxu0
  %989 = vdwg.mxu0
  %v991 = vsel %vm104, %v914, 0
  %993 = vmatprep.subr.mxu0 0.0
  %994 = vmatpush1.msra.mxu0 %v110
  %995 = vmatprep.subr.mxu0 0.0
  %996 = vmatpush1.msra.mxu0 0.0
  %997 = vmatprep.subr.mxu0 0.0
  %998 = vmatpush1.msra.mxu0 0.0
  %999 = vmatprep.subr.mxu0 0.0
  %1000 = vmatpush1.msra.mxu0 0.0
  %1001 = vmatprep.subr.mxu0 0.0
  %1002 = vmatpush1.msra.mxu0 0.0
  %1003 = vmatprep.subr.mxu0 0.0
  %1004 = vmatpush1.msra.mxu0 0.0
  %1005 = vmatprep.subr.mxu0 0.0
  %1006 = vmatpush1.msra.mxu0 0.0
  %1007 = vmatprep.subr.mxu0 0.0
  %1008 = vmatpush1.msra.mxu0 0.0
  %1009 = vmatprep.subr.mxu0 0.0
  %1010 = vmatpush1.msra.mxu0 0.0
  %1011 = vmatprep.subr.mxu0 0.0
  %1012 = vmatpush1.msra.mxu0 0.0
  %1013 = vmatprep.subr.mxu0 0.0
  %1014 = vmatpush1.msra.mxu0 0.0
  %1015 = vmatprep.subr.mxu0 0.0
  %1016 = vmatpush1.msra.mxu0 0.0
  %1017 = vmatprep.subr.mxu0 0.0
  %1018 = vmatpush1.msra.mxu0 0.0
  %1019 = vmatprep.subr.mxu0 0.0
  %1020 = vmatpush1.msra.mxu0 0.0
  %1021 = vmatprep.subr.mxu0 0.0
  %1022 = vmatpush1.msra.mxu0 0.0
  %1023 = vmatprep.subr.mxu0 0.0
  %1024 = vmatpush1.msra.mxu0 0.0
  %1025 = vmatprep.subr.mxu0 0.0
  %1026 = vmatpush1.msra.mxu0 0.0
  %1027 = vmatprep.subr.mxu0 0.0
  %1028 = vmatpush1.msra.mxu0 0.0
  %1029 = vmatprep.subr.mxu0 0.0
  %1030 = vmatpush1.msra.mxu0 0.0
  %1031 = vmatprep.subr.mxu0 0.0
  %1032 = vmatpush1.msra.mxu0 0.0
  %1033 = vmatprep.subr.mxu0 0.0
  %1034 = vmatpush1.msra.mxu0 0.0
  %1035 = vmatprep.subr.mxu0 0.0
  %1036 = vmatpush1.msra.mxu0 0.0
  %1037 = vmatprep.subr.mxu0 0.0
  %1038 = vmatpush1.msra.mxu0 0.0
  %1039 = vmatprep.subr.mxu0 0.0
  %1040 = vmatpush1.msra.mxu0 0.0
  %1041 = vmatprep.subr.mxu0 0.0
  %1042 = vmatpush1.msra.mxu0 0.0
  %1043 = vmatprep.subr.mxu0 0.0
  %1044 = vmatpush1.msra.mxu0 0.0
  %1045 = vmatprep.subr.mxu0 0.0
  %1046 = vmatpush1.msra.mxu0 0.0
  %1047 = vmatprep.subr.mxu0 0.0
  %1048 = vmatpush1.msra.mxu0 0.0
  %1049 = vmatprep.subr.mxu0 0.0
  %1050 = vmatpush1.msra.mxu0 0.0
  %1051 = vmatprep.subr.mxu0 0.0
  %1052 = vmatpush1.msra.mxu0 0.0
  %1053 = vmatprep.subr.mxu0 0.0
  %1054 = vmatpush1.msra.mxu0 0.0
  %1055 = vmatprep.subr.mxu0 0.0
  %1056 = vmatpush1.msra.mxu0 0.0
  %1057 = vmatprep.mubr.f32.mxu0 0.0
  %1058 = vmatmul.mubr.f32.gmra.mrb[0].mxu0 %v991
  %v1059 = vpop.f32.mrb[0].mxu0
  %v1060 = vadd.f32 %v987, %v1059
  %v1061 = vpop.f32.mrb[0].mxu0
  %1062 = vdwg.mxu0
  %v1063 = vadd.f32 %v1060, %v186
  %v1064 = vxor.u32 %v1063, 2147483648
  %v1065 = vmul.f32 %v1064, 1.442695
  %v1066 = vpow.pop %v1065
  %v1067 = vadd.f32 %v1066, 1.0
  %v1068 = vrcp.pop %v1067
  %v1069 = vmul.f32 1.0, %v1068
  %v1070 = vtanh.pop %v1063
  %v1071 = vmul.f32 %v1069, %v906
  %1073 = vrot.lane.b32.xlu0 %v1070, 64
  %v1074 = vpop.permute.xlu0 %1073
  %v1076 = vmul.f32 %v1069, %v1074
  %1078 = vrot.lane.b32.xlu0 %v1076, 32
  %v1079 = vpop.permute.xlu0 %1078
  %v1081 = vadd.f32 %v1071, %v1079
  %v1082 = vtanh.pop %v1081
  %1084 = vrot.lane.b32.xlu0 %v1082, 64
  %v1085 = vpop.permute.xlu0 %1084
  %v1087 = vmul.f32 %v1069, %v1085
  %s1088 = scalar_lea.vmem %s0, 48
  %v1089 = vld [vmem:[%s1088] sm:$0xff]
  %1091 = vrot.lane.b32.xlu0 %v1087, 32
  %v1092 = vpop.permute.xlu0 %1091
  %v1093 = vsel %vm30, %v1092, 0
  %1095 = vmatprep.subr.mxu0 0.0
  %1096 = vmatpush1.msra.mxu0 %v24
  %1097 = vmatprep.subr.mxu0 0.0
  %1098 = vmatpush1.msra.mxu0 %v25
  %1099 = vmatprep.subr.mxu0 0.0
  %1100 = vmatpush1.msra.mxu0 %v26
  %1101 = vmatprep.subr.mxu0 0.0
  %1102 = vmatpush1.msra.mxu0 %v27
  %1103 = vmatprep.subr.mxu0 0.0
  %1104 = vmatpush1.msra.mxu0 0.0
  %1105 = vmatprep.subr.mxu0 0.0
  %1106 = vmatpush1.msra.mxu0 0.0
  %1107 = vmatprep.subr.mxu0 0.0
  %1108 = vmatpush1.msra.mxu0 0.0
  %1109 = vmatprep.subr.mxu0 0.0
  %1110 = vmatpush1.msra.mxu0 0.0
  %1111 = vmatprep.subr.mxu0 0.0
  %1112 = vmatpush1.msra.mxu0 0.0
  %1113 = vmatprep.subr.mxu0 0.0
  %1114 = vmatpush1.msra.mxu0 0.0
  %1115 = vmatprep.subr.mxu0 0.0
  %1116 = vmatpush1.msra.mxu0 0.0
  %1117 = vmatprep.subr.mxu0 0.0
  %1118 = vmatpush1.msra.mxu0 0.0
  %1119 = vmatprep.subr.mxu0 0.0
  %1120 = vmatpush1.msra.mxu0 0.0
  %1121 = vmatprep.subr.mxu0 0.0
  %1122 = vmatpush1.msra.mxu0 0.0
  %1123 = vmatprep.subr.mxu0 0.0
  %1124 = vmatpush1.msra.mxu0 0.0
  %1125 = vmatprep.subr.mxu0 0.0
  %1126 = vmatpush1.msra.mxu0 0.0
  %1127 = vmatprep.subr.mxu0 0.0
  %1128 = vmatpush1.msra.mxu0 0.0
  %1129 = vmatprep.subr.mxu0 0.0
  %1130 = vmatpush1.msra.mxu0 0.0
  %1131 = vmatprep.subr.mxu0 0.0
  %1132 = vmatpush1.msra.mxu0 0.0
  %1133 = vmatprep.subr.mxu0 0.0
  %1134 = vmatpush1.msra.mxu0 0.0
  %1135 = vmatprep.subr.mxu0 0.0
  %1136 = vmatpush1.msra.mxu0 0.0
  %1137 = vmatprep.subr.mxu0 0.0
  %1138 = vmatpush1.msra.mxu0 0.0
  %1139 = vmatprep.subr.mxu0 0.0
  %1140 = vmatpush1.msra.mxu0 0.0
  %1141 = vmatprep.subr.mxu0 0.0
  %1142 = vmatpush1.msra.mxu0 0.0
  %1143 = vmatprep.subr.mxu0 0.0
  %1144 = vmatpush1.msra.mxu0 0.0
  %1145 = vmatprep.subr.mxu0 0.0
  %1146 = vmatpush1.msra.mxu0 0.0
  %1147 = vmatprep.subr.mxu0 0.0
  %1148 = vmatpush1.msra.mxu0 0.0
  %1149 = vmatprep.subr.mxu0 0.0
  %1150 = vmatpush1.msra.mxu0 0.0
  %1151 = vmatprep.subr.mxu0 0.0
  %1152 = vmatpush1.msra.mxu0 0.0
  %1153 = vmatprep.subr.mxu0 0.0
  %1154 = vmatpush1.msra.mxu0 0.0
  %1155 = vmatprep.subr.mxu0 0.0
  %1156 = vmatpush1.msra.mxu0 0.0
  %1157 = vmatprep.subr.mxu0 0.0
  %1158 = vmatpush1.msra.mxu0 0.0
  %1159 = vmatprep.mubr.f32.mxu0 0.0
  %1160 = vmatmul.mubr.f32.gmra.mrb[0].mxu0 %v1093
  %v1161 = vpop.f32.mrb[0].mxu0
  %v1162 = vadd.f32 0.0, %v1161
  %v1163 = vpop.f32.mrb[0].mxu0
  %1164 = vdwg.mxu0
  %v1166 = vsel %vm104, %v1089, 0
  %1168 = vmatprep.subr.mxu0 0.0
  %1169 = vmatpush1.msra.mxu0 %v110
  %1170 = vmatprep.subr.mxu0 0.0
  %1171 = vmatpush1.msra.mxu0 0.0
  %1172 = vmatprep.subr.mxu0 0.0
  %1173 = vmatpush1.msra.mxu0 0.0
  %1174 = vmatprep.subr.mxu0 0.0
  %1175 = vmatpush1.msra.mxu0 0.0
  %1176 = vmatprep.subr.mxu0 0.0
  %1177 = vmatpush1.msra.mxu0 0.0
  %1178 = vmatprep.subr.mxu0 0.0
  %1179 = vmatpush1.msra.mxu0 0.0
  %1180 = vmatprep.subr.mxu0 0.0
  %1181 = vmatpush1.msra.mxu0 0.0
  %1182 = vmatprep.subr.mxu0 0.0
  %1183 = vmatpush1.msra.mxu0 0.0
  %1184 = vmatprep.subr.mxu0 0.0
  %1185 = vmatpush1.msra.mxu0 0.0
  %1186 = vmatprep.subr.mxu0 0.0
  %1187 = vmatpush1.msra.mxu0 0.0
  %1188 = vmatprep.subr.mxu0 0.0
  %1189 = vmatpush1.msra.mxu0 0.0
  %1190 = vmatprep.subr.mxu0 0.0
  %1191 = vmatpush1.msra.mxu0 0.0
  %1192 = vmatprep.subr.mxu0 0.0
  %1193 = vmatpush1.msra.mxu0 0.0
  %1194 = vmatprep.subr.mxu0 0.0
  %1195 = vmatpush1.msra.mxu0 0.0
  %1196 = vmatprep.subr.mxu0 0.0
  %1197 = vmatpush1.msra.mxu0 0.0
  %1198 = vmatprep.subr.mxu0 0.0
  %1199 = vmatpush1.msra.mxu0 0.0
  %1200 = vmatprep.subr.mxu0 0.0
  %1201 = vmatpush1.msra.mxu0 0.0
  %1202 = vmatprep.subr.mxu0 0.0
  %1203 = vmatpush1.msra.mxu0 0.0
  %1204 = vmatprep.subr.mxu0 0.0
  %1205 = vmatpush1.msra.mxu0 0.0
  %1206 = vmatprep.subr.mxu0 0.0
  %1207 = vmatpush1.msra.mxu0 0.0
  %1208 = vmatprep.subr.mxu0 0.0
  %1209 = vmatpush1.msra.mxu0 0.0
  %1210 = vmatprep.subr.mxu0 0.0
  %1211 = vmatpush1.msra.mxu0 0.0
  %1212 = vmatprep.subr.mxu0 0.0
  %1213 = vmatpush1.msra.mxu0 0.0
  %1214 = vmatprep.subr.mxu0 0.0
  %1215 = vmatpush1.msra.mxu0 0.0
  %1216 = vmatprep.subr.mxu0 0.0
  %1217 = vmatpush1.msra.mxu0 0.0
  %1218 = vmatprep.subr.mxu0 0.0
  %1219 = vmatpush1.msra.mxu0 0.0
  %1220 = vmatprep.subr.mxu0 0.0
  %1221 = vmatpush1.msra.mxu0 0.0
  %1222 = vmatprep.subr.mxu0 0.0
  %1223 = vmatpush1.msra.mxu0 0.0
  %1224 = vmatprep.subr.mxu0 0.0
  %1225 = vmatpush1.msra.mxu0 0.0
  %1226 = vmatprep.subr.mxu0 0.0
  %1227 = vmatpush1.msra.mxu0 0.0
  %1228 = vmatprep.subr.mxu0 0.0
  %1229 = vmatpush1.msra.mxu0 0.0
  %1230 = vmatprep.subr.mxu0 0.0
  %1231 = vmatpush1.msra.mxu0 0.0
  %1232 = vmatprep.mubr.f32.mxu0 0.0
  %1233 = vmatmul.mubr.f32.gmra.mrb[0].mxu0 %v1166
  %v1234 = vpop.f32.mrb[0].mxu0
  %v1235 = vadd.f32 %v1162, %v1234
  %v1236 = vpop.f32.mrb[0].mxu0
  %1237 = vdwg.mxu0
  %v1238 = vadd.f32 %v1235, %v186
  %v1239 = vxor.u32 %v1238, 2147483648
  %v1240 = vmul.f32 %v1239, 1.442695
  %v1241 = vpow.pop %v1240
  %v1242 = vadd.f32 %v1241, 1.0
  %v1243 = vrcp.pop %v1242
  %v1244 = vmul.f32 1.0, %v1243
  %v1245 = vtanh.pop %v1238
  %v1246 = vmul.f32 %v1244, %v1081
  %1248 = vrot.lane.b32.xlu0 %v1245, 64
  %v1249 = vpop.permute.xlu0 %1248
  %v1251 = vmul.f32 %v1244, %v1249
  %1253 = vrot.lane.b32.xlu0 %v1251, 32
  %v1254 = vpop.permute.xlu0 %1253
  %v1256 = vadd.f32 %v1246, %v1254
  %v1257 = vtanh.pop %v1256
  %1259 = vrot.lane.b32.xlu0 %v1257, 64
  %v1260 = vpop.permute.xlu0 %1259
  %v1262 = vmul.f32 %v1244, %v1260
  %s1263 = scalar_lea.vmem %s0, 56
  %v1264 = vld [vmem:[%s1263] sm:$0xff]
  %1266 = vrot.lane.b32.xlu0 %v1262, 32
  %v1267 = vpop.permute.xlu0 %1266
  %v1268 = vsel %vm30, %v1267, 0
  %1270 = vmatprep.subr.mxu0 0.0
  %1271 = vmatpush1.msra.mxu0 %v24
  %1272 = vmatprep.subr.mxu0 0.0
  %1273 = vmatpush1.msra.mxu0 %v25
  %1274 = vmatprep.subr.mxu0 0.0
  %1275 = vmatpush1.msra.mxu0 %v26
  %1276 = vmatprep.subr.mxu0 0.0
  %1277 = vmatpush1.msra.mxu0 %v27
  %1278 = vmatprep.subr.mxu0 0.0
  %1279 = vmatpush1.msra.mxu0 0.0
  %1280 = vmatprep.subr.mxu0 0.0
  %1281 = vmatpush1.msra.mxu0 0.0
  %1282 = vmatprep.subr.mxu0 0.0
  %1283 = vmatpush1.msra.mxu0 0.0
  %1284 = vmatprep.subr.mxu0 0.0
  %1285 = vmatpush1.msra.mxu0 0.0
  %1286 = vmatprep.subr.mxu0 0.0
  %1287 = vmatpush1.msra.mxu0 0.0
  %1288 = vmatprep.subr.mxu0 0.0
  %1289 = vmatpush1.msra.mxu0 0.0
  %1290 = vmatprep.subr.mxu0 0.0
  %1291 = vmatpush1.msra.mxu0 0.0
  %1292 = vmatprep.subr.mxu0 0.0
  %1293 = vmatpush1.msra.mxu0 0.0
  %1294 = vmatprep.subr.mxu0 0.0
  %1295 = vmatpush1.msra.mxu0 0.0
  %1296 = vmatprep.subr.mxu0 0.0
  %1297 = vmatpush1.msra.mxu0 0.0
  %1298 = vmatprep.subr.mxu0 0.0
  %1299 = vmatpush1.msra.mxu0 0.0
  %1300 = vmatprep.subr.mxu0 0.0
  %1301 = vmatpush1.msra.mxu0 0.0
  %1302 = vmatprep.subr.mxu0 0.0
  %1303 = vmatpush1.msra.mxu0 0.0
  %1304 = vmatprep.subr.mxu0 0.0
  %1305 = vmatpush1.msra.mxu0 0.0
  %1306 = vmatprep.subr.mxu0 0.0
  %1307 = vmatpush1.msra.mxu0 0.0
  %1308 = vmatprep.subr.mxu0 0.0
  %1309 = vmatpush1.msra.mxu0 0.0
  %1310 = vmatprep.subr.mxu0 0.0
  %1311 = vmatpush1.msra.mxu0 0.0
  %1312 = vmatprep.subr.mxu0 0.0
  %1313 = vmatpush1.msra.mxu0 0.0
  %1314 = vmatprep.subr.mxu0 0.0
  %1315 = vmatpush1.msra.mxu0 0.0
  %1316 = vmatprep.subr.mxu0 0.0
  %1317 = vmatpush1.msra.mxu0 0.0
  %1318 = vmatprep.subr.mxu0 0.0
  %1319 = vmatpush1.msra.mxu0 0.0
  %1320 = vmatprep.subr.mxu0 0.0
  %1321 = vmatpush1.msra.mxu0 0.0
  %1322 = vmatprep.subr.mxu0 0.0
  %1323 = vmatpush1.msra.mxu0 0.0
  %1324 = vmatprep.subr.mxu0 0.0
  %1325 = vmatpush1.msra.mxu0 0.0
  %1326 = vmatprep.subr.mxu0 0.0
  %1327 = vmatpush1.msra.mxu0 0.0
  %1328 = vmatprep.subr.mxu0 0.0
  %1329 = vmatpush1.msra.mxu0 0.0
  %1330 = vmatprep.subr.mxu0 0.0
  %1331 = vmatpush1.msra.mxu0 0.0
  %1332 = vmatprep.subr.mxu0 0.0
  %1333 = vmatpush1.msra.mxu0 0.0
  %1334 = vmatprep.mubr.f32.mxu0 0.0
  %1335 = vmatmul.mubr.f32.gmra.mrb[0].mxu0 %v1268
  %v1336 = vpop.f32.mrb[0].mxu0
  %v1337 = vadd.f32 0.0, %v1336
  %v1338 = vpop.f32.mrb[0].mxu0
  %1339 = vdwg.mxu0
  %v1341 = vsel %vm104, %v1264, 0
  %1343 = vmatprep.subr.mxu0 0.0
  %1344 = vmatpush1.msra.mxu0 %v110
  %1345 = vmatprep.subr.mxu0 0.0
  %1346 = vmatpush1.msra.mxu0 0.0
  %1347 = vmatprep.subr.mxu0 0.0
  %1348 = vmatpush1.msra.mxu0 0.0
  %1349 = vmatprep.subr.mxu0 0.0
  %1350 = vmatpush1.msra.mxu0 0.0
  %1351 = vmatprep.subr.mxu0 0.0
  %1352 = vmatpush1.msra.mxu0 0.0
  %1353 = vmatprep.subr.mxu0 0.0
  %1354 = vmatpush1.msra.mxu0 0.0
  %1355 = vmatprep.subr.mxu0 0.0
  %1356 = vmatpush1.msra.mxu0 0.0
  %1357 = vmatprep.subr.mxu0 0.0
  %1358 = vmatpush1.msra.mxu0 0.0
  %1359 = vmatprep.subr.mxu0 0.0
  %1360 = vmatpush1.msra.mxu0 0.0
  %1361 = vmatprep.subr.mxu0 0.0
  %1362 = vmatpush1.msra.mxu0 0.0
  %1363 = vmatprep.subr.mxu0 0.0
  %1364 = vmatpush1.msra.mxu0 0.0
  %1365 = vmatprep.subr.mxu0 0.0
  %1366 = vmatpush1.msra.mxu0 0.0
  %1367 = vmatprep.subr.mxu0 0.0
  %1368 = vmatpush1.msra.mxu0 0.0
  %1369 = vmatprep.subr.mxu0 0.0
  %1370 = vmatpush1.msra.mxu0 0.0
  %1371 = vmatprep.subr.mxu0 0.0
  %1372 = vmatpush1.msra.mxu0 0.0
  %1373 = vmatprep.subr.mxu0 0.0
  %1374 = vmatpush1.msra.mxu0 0.0
  %1375 = vmatprep.subr.mxu0 0.0
  %1376 = vmatpush1.msra.mxu0 0.0
  %1377 = vmatprep.subr.mxu0 0.0
  %1378 = vmatpush1.msra.mxu0 0.0
  %1379 = vmatprep.subr.mxu0 0.0
  %1380 = vmatpush1.msra.mxu0 0.0
  %1381 = vmatprep.subr.mxu0 0.0
  %1382 = vmatpush1.msra.mxu0 0.0
  %1383 = vmatprep.subr.mxu0 0.0
  %1384 = vmatpush1.msra.mxu0 0.0
  %1385 = vmatprep.subr.mxu0 0.0
  %1386 = vmatpush1.msra.mxu0 0.0
  %1387 = vmatprep.subr.mxu0 0.0
  %1388 = vmatpush1.msra.mxu0 0.0
  %1389 = vmatprep.subr.mxu0 0.0
  %1390 = vmatpush1.msra.mxu0 0.0
  %1391 = vmatprep.subr.mxu0 0.0
  %1392 = vmatpush1.msra.mxu0 0.0
  %1393 = vmatprep.subr.mxu0 0.0
  %1394 = vmatpush1.msra.mxu0 0.0
  %1395 = vmatprep.subr.mxu0 0.0
  %1396 = vmatpush1.msra.mxu0 0.0
  %1397 = vmatprep.subr.mxu0 0.0
  %1398 = vmatpush1.msra.mxu0 0.0
  %1399 = vmatprep.subr.mxu0 0.0
  %1400 = vmatpush1.msra.mxu0 0.0
  %1401 = vmatprep.subr.mxu0 0.0
  %1402 = vmatpush1.msra.mxu0 0.0
  %1403 = vmatprep.subr.mxu0 0.0
  %1404 = vmatpush1.msra.mxu0 0.0
  %1405 = vmatprep.subr.mxu0 0.0
  %1406 = vmatpush1.msra.mxu0 0.0
  %1407 = vmatprep.mubr.f32.mxu0 0.0
  %1408 = vmatmul.mubr.f32.gmra.mrb[0].mxu0 %v1341
  %v1409 = vpop.f32.mrb[0].mxu0
  %v1410 = vadd.f32 %v1337, %v1409
  %v1411 = vpop.f32.mrb[0].mxu0
  %1412 = vdwg.mxu0
  %v1413 = vadd.f32 %v1410, %v186
  %v1414 = vxor.u32 %v1413, 2147483648
  %v1415 = vmul.f32 %v1414, 1.442695
  %v1416 = vpow.pop %v1415
  %v1417 = vadd.f32 %v1416, 1.0
  %v1418 = vrcp.pop %v1417
  %v1419 = vmul.f32 1.0, %v1418
  %v1420 = vtanh.pop %v1413
  %v1421 = vmul.f32 %v1419, %v1256
  %1423 = vrot.lane.b32.xlu0 %v1420, 64
  %v1424 = vpop.permute.xlu0 %1423
  %v1426 = vmul.f32 %v1419, %v1424
  %1428 = vrot.lane.b32.xlu0 %v1426, 32
  %v1429 = vpop.permute.xlu0 %1428
  %v1431 = vadd.f32 %v1421, %v1429
  %v1432 = vtanh.pop %v1431
  %1434 = vrot.lane.b32.xlu0 %v1432, 64
  %v1435 = vpop.permute.xlu0 %1434
  %v1437 = vmul.f32 %v1419, %v1435
  %v1438 = vld [vmem:[%s4] sm:$0xff]
  %v1439 = vld [vmem:[%s4 + $0x8] sm:$0xff]
  %v1440 = vld [vmem:[%s4 + $0x10] sm:$0xff]
  %v1441 = vld [vmem:[%s4 + $0x18] sm:$0xff]
  %v1442 = vld [vmem:[%s5] sm:$0x1]
  %v1444 = vlaneseq
  %v1445 = vshrl.u32 %v1444, 7
  %v1446 = vsub.s32 0, %v1445
  %v1447 = vrot.slane %v1442, %v1446
  %1450 = vrot.lane.b32.xlu0 %v1437, 32
  %v1451 = vpop.permute.xlu0 %1450
  %v1452 = vsel %vm30, %v1451, 0
  %1454 = vmatprep.subr.mxu0 0.0
  %1455 = vmatpush1.msra.mxu0 %v1438
  %1456 = vmatprep.subr.mxu0 0.0
  %1457 = vmatpush1.msra.mxu0 %v1439
  %1458 = vmatprep.subr.mxu0 0.0
  %1459 = vmatpush1.msra.mxu0 %v1440
  %1460 = vmatprep.subr.mxu0 0.0
  %1461 = vmatpush1.msra.mxu0 %v1441
  %1462 = vmatprep.subr.mxu0 0.0
  %1463 = vmatpush1.msra.mxu0 0.0
  %1464 = vmatprep.subr.mxu0 0.0
  %1465 = vmatpush1.msra.mxu0 0.0
  %1466 = vmatprep.subr.mxu0 0.0
  %1467 = vmatpush1.msra.mxu0 0.0
  %1468 = vmatprep.subr.mxu0 0.0
  %1469 = vmatpush1.msra.mxu0 0.0
  %1470 = vmatprep.subr.mxu0 0.0
  %1471 = vmatpush1.msra.mxu0 0.0
  %1472 = vmatprep.subr.mxu0 0.0
  %1473 = vmatpush1.msra.mxu0 0.0
  %1474 = vmatprep.subr.mxu0 0.0
  %1475 = vmatpush1.msra.mxu0 0.0
  %1476 = vmatprep.subr.mxu0 0.0
  %1477 = vmatpush1.msra.mxu0 0.0
  %1478 = vmatprep.subr.mxu0 0.0
  %1479 = vmatpush1.msra.mxu0 0.0
  %1480 = vmatprep.subr.mxu0 0.0
  %1481 = vmatpush1.msra.mxu0 0.0
  %1482 = vmatprep.subr.mxu0 0.0
  %1483 = vmatpush1.msra.mxu0 0.0
  %1484 = vmatprep.subr.mxu0 0.0
  %1485 = vmatpush1.msra.mxu0 0.0
  %1486 = vmatprep.subr.mxu0 0.0
  %1487 = vmatpush1.msra.mxu0 0.0
  %1488 = vmatprep.subr.mxu0 0.0
  %1489 = vmatpush1.msra.mxu0 0.0
  %1490 = vmatprep.subr.mxu0 0.0
  %1491 = vmatpush1.msra.mxu0 0.0
  %1492 = vmatprep.subr.mxu0 0.0
  %1493 = vmatpush1.msra.mxu0 0.0
  %1494 = vmatprep.subr.mxu0 0.0
  %1495 = vmatpush1.msra.mxu0 0.0
  %1496 = vmatprep.subr.mxu0 0.0
  %1497 = vmatpush1.msra.mxu0 0.0
  %1498 = vmatprep.subr.mxu0 0.0
  %1499 = vmatpush1.msra.mxu0 0.0
  %1500 = vmatprep.subr.mxu0 0.0
  %1501 = vmatpush1.msra.mxu0 0.0
  %1502 = vmatprep.subr.mxu0 0.0
  %1503 = vmatpush1.msra.mxu0 0.0
  %1504 = vmatprep.subr.mxu0 0.0
  %1505 = vmatpush1.msra.mxu0 0.0
  %1506 = vmatprep.subr.mxu0 0.0
  %1507 = vmatpush1.msra.mxu0 0.0
  %1508 = vmatprep.subr.mxu0 0.0
  %1509 = vmatpush1.msra.mxu0 0.0
  %1510 = vmatprep.subr.mxu0 0.0
  %1511 = vmatpush1.msra.mxu0 0.0
  %1512 = vmatprep.subr.mxu0 0.0
  %1513 = vmatpush1.msra.mxu0 0.0
  %1514 = vmatprep.subr.mxu0 0.0
  %1515 = vmatpush1.msra.mxu0 0.0
  %1516 = vmatprep.subr.mxu0 0.0
  %1517 = vmatpush1.msra.mxu0 0.0
  %1518 = vmatprep.mubr.f32.mxu0 0.0
  %1519 = vmatmul.mubr.f32.gmra.mrb[0].mxu0 %v1452
  %v1520 = vpop.f32.mrb[0].mxu0
  %v1521 = vadd.f32 %v1447, %v1520
  %v1522 = vpop.f32.mrb[0].mxu0
  %1523 = vdwg.mxu0
  %1524 = vst [vmem:[%s6] sm:$0xff] %v1521
  // Predicated region
  $region26: #{ecg_lstm_forward.1} parent=0 // pred_check
    _
  $region27: #{ecg_lstm_forward.1} parent=0 // pred_check_branch
    %1526 = sbr.rel (0) target = $region29
  $region28: #{ecg_lstm_forward.1} parent=0 // pred_region
    _
  $region29: #{ecg_lstm_forward.1} parent=0 // pred_fallthru
    _
  // Predicated region
  $region30: #{ecg_lstm_forward.1} parent=0 // pred_check
    _
  $region31: #{ecg_lstm_forward.1} parent=0 // pred_check_branch
    %1528 = sbr.rel (0) target = $region33
  $region32: #{ecg_lstm_forward.1} parent=0 // pred_region
    _
  $region33: #{ecg_lstm_forward.1} parent=0 // pred_fallthru
    _

</llo_original>
